<compile_context>
chip_gen: v7x
topology: tpu7x:2x2x1
jax: 0.10.0
libtpu: 0.0.40
codegen_flags: <defaults>
</compile_context>

<pallas_src>
import functools

import jax
import jax.numpy as jnp
from jax.experimental import pallas as pl
from jax.experimental.pallas import tpu as pltpu


# ------------------------------- helpers ------------------------------------


def _round_up(x, m):
    return (x + m - 1) // m * m


# ----------------------- generic tiled linear (fc1) --------------------------


def _linear_kernel(x_ref, w_ref, b_ref, o_ref, *, activation):
    k = pl.program_id(2)

    @pl.when(k == 0)
    def _():
        # Fold the bias into the accumulator init; the o_ref block is resident
        # across the k axis (same block index for every k).
        o_ref[...] = jnp.broadcast_to(b_ref[...].astype(jnp.float32), o_ref.shape)

    o_ref[...] += jnp.dot(
        x_ref[...], w_ref[...], preferred_element_type=jnp.float32
    )

    if activation == "relu":
        @pl.when(k == pl.num_programs(2) - 1)
        def _():
            o_ref[...] = jnp.maximum(o_ref[...], 0.0)


def linear(x, w, b, activation="none"):
    """activation(x @ w + b).  x: (M, K), w: (K, N) [pre-transposed], b: (N,)."""
    M, K = x.shape
    K2, N = w.shape
    assert K == K2, (K, K2)

    x = x.astype(w.dtype)  # bf16 inputs to the MXU, f32 accumulation.

    # Bounded tiles: pad K/N to 128 multiples, cap tiles (tm<=256, tk/tn<=512)
    # so VMEM use stays small and pipelining survives at real layer widths.
    tk = min(512, _round_up(K, 128))
    tn = min(512, _round_up(N, 128))
    Kp = _round_up(K, tk)
    Np = _round_up(N, tn)
    Mp = _round_up(M, 8)
    tm = min(256, Mp)
    Mp = _round_up(Mp, tm)

    if (Mp, Kp) != (M, K):
        x = jnp.pad(x, ((0, Mp - M), (0, Kp - K)))
    if (Kp, Np) != (K, N):
        w = jnp.pad(w, ((0, Kp - K), (0, Np - N)))
    b2 = b.reshape(1, N)
    if Np != N:
        b2 = jnp.pad(b2, ((0, 0), (0, Np - N)))

    kernel = functools.partial(_linear_kernel, activation=activation)
    out = pl.pallas_call(
        kernel,
        out_shape=jax.ShapeDtypeStruct((Mp, Np), jnp.float32),
        grid_spec=pltpu.PrefetchScalarGridSpec(
            num_scalar_prefetch=0,
            grid=(Mp // tm, Np // tn, Kp // tk),
            in_specs=[
                pl.BlockSpec((tm, tk), lambda i, j, k: (i, k)),
                pl.BlockSpec((tk, tn), lambda i, j, k: (k, j)),
                pl.BlockSpec((1, tn), lambda i, j, k: (0, j)),
            ],
            out_specs=pl.BlockSpec((tm, tn), lambda i, j, k: (i, j)),
        ),
        compiler_params=pltpu.CompilerParams(
            dimension_semantics=("parallel", "parallel", "arbitrary"),
        ),
    )(x, w, b2)

    if (Mp, Np) != (M, N):
        out = out[:M, :N]
    return out


# ------------------- fused spiking stage (timestep loop) ---------------------


def _spiking_kernel(cur1_ref, rw1_ref, w2_ref, b2_ref, rw2_ref,
                    spk_rec_ref,
                    spk1_ref, mem1_ref, spk2_ref, mem2_ref,
                    *, beta, threshold):
    t = pl.program_id(0)

    @pl.when(t == 0)
    def _():
        spk1_ref[...] = jnp.zeros_like(spk1_ref)
        mem1_ref[...] = jnp.zeros_like(mem1_ref)
        spk2_ref[...] = jnp.zeros_like(spk2_ref)
        mem2_ref[...] = jnp.zeros_like(mem2_ref)

    dt = rw1_ref.dtype  # bf16 compute dtype for the MXU inputs

    # ---- RLeaky layer 1 (recurrent matmul + membrane update) ----
    # rec1's bias is pre-folded into cur1 (it is constant across time).
    spk1_prev = spk1_ref[...]
    mem1_prev = mem1_ref[...]
    rec1 = jnp.dot(spk1_prev.astype(dt), rw1_ref[...],
                   preferred_element_type=jnp.float32)
    mem1 = beta * mem1_prev + cur1_ref[...] + rec1 - spk1_prev * threshold
    spk1 = (mem1 > threshold).astype(jnp.float32)
    spk1_ref[...] = spk1
    mem1_ref[...] = mem1

    # ---- fc2 + RLeaky layer 2 ----
    # b2_ref already holds fc2_b + rec2_b (both added every step).
    spk2_prev = spk2_ref[...]
    mem2_prev = mem2_ref[...]
    cur2 = jnp.dot(spk1.astype(dt), w2_ref[...],
                   preferred_element_type=jnp.float32) + b2_ref[...]
    rec2 = jnp.dot(spk2_prev.astype(dt), rw2_ref[...],
                   preferred_element_type=jnp.float32)
    mem2 = beta * mem2_prev + cur2 + rec2 - spk2_prev * threshold
    spk2 = (mem2 > threshold).astype(jnp.float32)
    spk2_ref[...] = spk2
    mem2_ref[...] = mem2

    # Spikes are exactly 0/1 -> record in bf16 to halve HBM traffic.
    spk_rec_ref[...] = spk2.astype(spk_rec_ref.dtype)


def spiking_stage(cur1, rec1_w, fc2_w, fc2b_comb, rec2_w,
                  *, timesteps, beta, threshold):
    """Runs the whole timestep loop in one pallas_call.

    cur1: (M, H1) f32 (fc1 output + rec1 bias, constant across time,
          VMEM-resident).
    fc2b_comb: (H2,) f32 == fc2_b + rec2_b.
    Returns spk2 recording: (T, M, H2) bf16.
    """
    M, H1 = cur1.shape
    H2 = fc2_w.shape[1]

    kernel = functools.partial(_spiking_kernel, beta=beta, threshold=threshold)
    return pl.pallas_call(
        kernel,
        out_shape=jax.ShapeDtypeStruct((timesteps, M, H2), jnp.bfloat16),
        grid_spec=pltpu.PrefetchScalarGridSpec(
            num_scalar_prefetch=0,
            grid=(timesteps,),
            in_specs=[
                pl.BlockSpec((M, H1), lambda t: (0, 0)),   # cur1      (resident)
                pl.BlockSpec((H1, H1), lambda t: (0, 0)),  # rec1_w    (resident)
                pl.BlockSpec((H1, H2), lambda t: (0, 0)),  # fc2_w     (resident)
                pl.BlockSpec((1, H2), lambda t: (0, 0)),   # fc2_b+rec2_b
                pl.BlockSpec((H2, H2), lambda t: (0, 0)),  # rec2_w    (resident)
            ],
            out_specs=pl.BlockSpec((None, M, H2), lambda t: (t, 0, 0)),
            scratch_shapes=[
                pltpu.VMEM((M, H1), jnp.float32),  # spk1
                pltpu.VMEM((M, H1), jnp.float32),  # mem1
                pltpu.VMEM((M, H2), jnp.float32),  # spk2
                pltpu.VMEM((M, H2), jnp.float32),  # mem2
            ],
        ),
        compiler_params=pltpu.CompilerParams(
            dimension_semantics=("arbitrary",),  # state carried across t
        ),
    )(cur1, rec1_w, fc2_w, fc2b_comb.reshape(1, -1), rec2_w)


# ----------------------- fused readout MLP (fc3..fc8) ------------------------


def _mlp_kernel(h_ref,
                w3, b3, w4, b4, w5, b5, w6, b6, w7, b7, w8, b8,
                o_ref):
    def dense(x, w_ref, b_ref, relu):
        y = jnp.dot(x.astype(w_ref.dtype), w_ref[...],
                    preferred_element_type=jnp.float32) + b_ref[...]
        return jnp.maximum(y, 0.0) if relu else y

    x = h_ref[...]
    x = dense(x, w3, b3, True)
    x = dense(x, w4, b4, True)
    x = dense(x, w5, b5, True)
    x = dense(x, w6, b6, True)
    x = dense(x, w7, b7, True)
    o_ref[...] = dense(x, w8, b8, False)


def mlp_readout(h, params):
    """fc3..fc8 fused into one kernel.  h: (M, D_in) -> (M, 2) f32."""
    M, D = h.shape
    ws = [params[f"fc{i}_w"] for i in range(3, 9)]
    bs = [params[f"fc{i}_b"].reshape(1, -1) for i in range(3, 9)]
    N_out = ws[-1].shape[1]

    Mp = _round_up(M, 8)
    tm = min(256, Mp)
    Mp = _round_up(Mp, tm)
    hp = h if Mp == M else jnp.pad(h, ((0, Mp - M), (0, 0)))

    in_specs = [pl.BlockSpec((tm, D), lambda i: (i, 0))]
    operands = [hp]
    for w, b in zip(ws, bs):
        in_specs.append(pl.BlockSpec(w.shape, lambda i: (0, 0)))  # resident
        in_specs.append(pl.BlockSpec(b.shape, lambda i: (0, 0)))
        operands.append(w)
        operands.append(b)

    out = pl.pallas_call(
        _mlp_kernel,
        out_shape=jax.ShapeDtypeStruct((Mp, N_out), jnp.float32),
        grid_spec=pltpu.PrefetchScalarGridSpec(
            num_scalar_prefetch=0,
            grid=(Mp // tm,),
            in_specs=in_specs,
            out_specs=pl.BlockSpec((tm, N_out), lambda i: (i, 0)),
        ),
        compiler_params=pltpu.CompilerParams(
            dimension_semantics=("parallel",),
        ),
    )(*operands)
    return out[:M]


# ------------------------------ model setup ----------------------------------


def init_linear_params(key, in_f, out_f, w_dtype=jnp.bfloat16):
    k1, k2 = jax.random.split(key)
    bound = 1.0 / jnp.sqrt(jnp.float32(in_f))
    w = jax.random.uniform(k1, (in_f, out_f), jnp.float32, -bound, bound)
    b = jax.random.uniform(k2, (out_f,), jnp.float32, -bound, bound)
    # Weights in bf16 (halves HBM traffic, native MXU dtype); biases stay f32.
    return w.astype(w_dtype), b


def init_net_params(key, d_in, h1, h2, c, d3, d4, d5, d6, d7, d8):
    names_shapes = [
        ("fc1", d_in, h1),
        ("rec1", h1, h1),      # RLeaky recurrent linear (linear_features=h1)
        ("fc2", h1, h2),
        ("rec2", h2, h2),      # RLeaky recurrent linear (linear_features=h2)
        ("fc3", c * h2, d3),
        ("fc4", d3, d4),
        ("fc5", d4, d5),
        ("fc6", d5, d6),
        ("fc7", d6, d7),
        ("fc8", d7, d8),
    ]
    params = {}
    keys = jax.random.split(key, len(names_shapes))
    for k, (name, fi, fo) in zip(keys, names_shapes):
        w, b = init_linear_params(k, fi, fo)
        params[name + "_w"] = w
        params[name + "_b"] = b
    return params


def net_forward(params, x, *, timesteps, beta, threshold=1.0):
    """x: (B, C, H, W) float32 -> (B, T, 2) float32."""
    B, C = x.shape[0], x.shape[1]
    h2 = params["fc2_w"].shape[1]

    # x.view(B, C, -1); flatten batch dims into rows for the kernels.
    x2 = x.reshape(B * C, -1)

    # fc1(x) (+ rec1's bias, which is constant across timesteps) is computed
    # once and kept VMEM-resident inside the fused spiking kernel.
    cur1 = linear(x2, params["fc1_w"], params["fc1_b"] + params["rec1_b"])

    # Entire timestep loop (rec1 -> RLeaky1 -> fc2 -> rec2 -> RLeaky2) fused.
    # fc2's and rec2's biases are added every step -> fold into one bias.
    spk_rec = spiking_stage(
        cur1,
        params["rec1_w"],
        params["fc2_w"], params["fc2_b"] + params["rec2_b"],
        params["rec2_w"],
        timesteps=timesteps, beta=beta, threshold=threshold,
    )                                              # (T, B*C, h2) bf16

    # stack -> (T, B, C, h2) -> view(T, B, C*h2); rows = T*B for the MLP.
    h = spk_rec.reshape(timesteps * B, C * h2)

    # fc3..fc8 fused into a single kernel.
    out2 = mlp_readout(h, params)                  # (T*B, 2) f32

    # final_output.view(B, T, -1)  (raw memory reinterpretation, as in torch)
    out = out2.reshape(timesteps, B, -1).reshape(B, timesteps, -1)
    return out


# --------------------------------- main --------------------------------------

if __name__ == "__main__":
    # Scaled-down sizes (originals in comments).
    B, C = 2, 4                  # batch, channels
    Hs, Ws = 16, 16              # spatial -> D_in = 256    (orig 14400)
    D_in = Hs * Ws
    H1 = 256                     # rlif1 features           (orig 7700)
    H2 = 128                     # rlif2 features           (orig 500)
    D3, D4, D5, D6, D7, D8 = 256, 128, 128, 32, 16, 2
    T = 3                        # timesteps
    BETA = 0.9

    key = jax.random.PRNGKey(0)
    kp, kx = jax.random.split(key)
    params = init_net_params(kp, D_in, H1, H2, C, D3, D4, D5, D6, D7, D8)
    x = jax.random.normal(kx, (B, C, Hs, Ws), jnp.float32)

    fwd = jax.jit(functools.partial(net_forward, timesteps=T, beta=BETA))
    out = fwd(params, x)
    out = jax.block_until_ready(out)

    assert out.shape == (B, T, 2), out.shape
    assert bool(jnp.all(jnp.isfinite(out)))
    print("KERNEL_OK")
</pallas_src>

<mosaic_0001>
module attributes {stable_mosaic.version = 11 : i64} {
  func.func @_linear_kernel(%arg0: i32, %arg1: i32, %arg2: i32, %arg3: memref<8x256xbf16, #tpu.memory_space<vmem>>, %arg4: memref<256x256xbf16, #tpu.memory_space<vmem>>, %arg5: memref<1x256xf32, #tpu.memory_space<vmem>>, %arg6: memref<8x256xf32, #tpu.memory_space<vmem>>) attributes {dimension_semantics = [#tpu.dimension_semantics<parallel>, #tpu.dimension_semantics<parallel>, #tpu.dimension_semantics<arbitrary>], iteration_bounds = array<i64: 1, 1, 1>, scalar_prefetch = 0 : i64, scratch_operands = 0 : i64, tpu.core_type = #tpu.core_type<tc>, window_params = [{transform_indices = @transform_0, window_bounds = array<i64: 8, 256>}, {transform_indices = @transform_1, window_bounds = array<i64: 256, 256>}, {transform_indices = @transform_2, window_bounds = array<i64: 1, 256>}, {transform_indices = @transform_3, window_bounds = array<i64: 8, 256>}]} {
    %c0_i32 = arith.constant 0 : i32
    %0 = arith.cmpi eq, %arg2, %c0_i32 : i32
    %1 = arith.extui %0 : i1 to i32
    %c0_i32_0 = arith.constant 0 : i32
    %2 = arith.cmpi ne, %1, %c0_i32_0 : i32
    scf.if %2 {
      %c0_8 = arith.constant 0 : index
      %c0_9 = arith.constant 0 : index
      %9 = vector.load %arg5[%c0_8, %c0_9] : memref<1x256xf32, #tpu.memory_space<vmem>>, vector<1x256xf32>
      %10 = vector.shape_cast %9 : vector<1x256xf32> to vector<1x256xf32>
      %11 = vector.broadcast %10 : vector<1x256xf32> to vector<8x256xf32>
      %c0_10 = arith.constant 0 : index
      %c0_11 = arith.constant 0 : index
      %12 = vector.load %arg6[%c0_10, %c0_11] : memref<8x256xf32, #tpu.memory_space<vmem>>, vector<8x256xf32>
      tpu.vector_store %arg6[%c0_10, %c0_11], %11 {strides = array<i32>} : memref<8x256xf32, #tpu.memory_space<vmem>>, vector<8x256xf32>,
    } else {
    }
    %c0 = arith.constant 0 : index
    %c0_1 = arith.constant 0 : index
    %3 = vector.load %arg6[%c0, %c0_1] : memref<8x256xf32, #tpu.memory_space<vmem>>, vector<8x256xf32>
    %c0_2 = arith.constant 0 : index
    %c0_3 = arith.constant 0 : index
    %4 = vector.load %arg3[%c0_2, %c0_3] : memref<8x256xbf16, #tpu.memory_space<vmem>>, vector<8x256xbf16>
    %c0_4 = arith.constant 0 : index
    %c0_5 = arith.constant 0 : index
    %5 = vector.load %arg4[%c0_4, %c0_5] : memref<256x256xbf16, #tpu.memory_space<vmem>>, vector<256x256xbf16>
    %cst = arith.constant dense<0.000000e+00> : vector<8x256xf32>
    %6 = tpu.matmul %4, %5, %cst {dimension_numbers = #tpu.dot_dimension_numbers<[1], [0], [0], [1], [0, 0, 1, 1], [], []>} : vector<8x256xbf16>, vector<256x256xbf16>, vector<8x256xf32> -> vector<8x256xf32>
    %7 = arith.addf %3, %6 : vector<8x256xf32>
    %c0_6 = arith.constant 0 : index
    %c0_7 = arith.constant 0 : index
    %8 = vector.load %arg6[%c0_6, %c0_7] : memref<8x256xf32, #tpu.memory_space<vmem>>, vector<8x256xf32>
    tpu.vector_store %arg6[%c0_6, %c0_7], %7 {strides = array<i32>} : memref<8x256xf32, #tpu.memory_space<vmem>>, vector<8x256xf32>,
    return
  }
  func.func @transform_0(%arg0: i32, %arg1: i32, %arg2: i32) -> (i32, i32) {
    %c0_i32 = arith.constant 0 : i32
    return %arg0, %arg2 : i32, i32
  }
  func.func @transform_1(%arg0: i32, %arg1: i32, %arg2: i32) -> (i32, i32) {
    %c0_i32 = arith.constant 0 : i32
    return %arg2, %arg1 : i32, i32
  }
  func.func @transform_2(%arg0: i32, %arg1: i32, %arg2: i32) -> (i32, i32) {
    %c0_i32 = arith.constant 0 : i32
    %c0_i32_0 = arith.constant 0 : i32
    return %c0_i32, %arg1 : i32, i32
  }
  func.func @transform_3(%arg0: i32, %arg1: i32, %arg2: i32) -> (i32, i32) {
    %c0_i32 = arith.constant 0 : i32
    return %arg0, %arg1 : i32, i32
  }
}

module attributes {stable_mosaic.version = 11 : i64} {
  func.func @_spiking_kernel(%arg0: i32, %arg1: memref<8x256xf32, #tpu.memory_space<vmem>>, %arg2: memref<256x256xbf16, #tpu.memory_space<vmem>>, %arg3: memref<256x128xbf16, #tpu.memory_space<vmem>>, %arg4: memref<1x128xf32, #tpu.memory_space<vmem>>, %arg5: memref<128x128xbf16, #tpu.memory_space<vmem>>, %arg6: memref<1x8x128xbf16, #tpu.memory_space<vmem>>, %arg7: memref<8x256xf32, #tpu.memory_space<vmem>>, %arg8: memref<8x256xf32, #tpu.memory_space<vmem>>, %arg9: memref<8x128xf32, #tpu.memory_space<vmem>>, %arg10: memref<8x128xf32, #tpu.memory_space<vmem>>) attributes {dimension_semantics = [#tpu.dimension_semantics<arbitrary>], iteration_bounds = array<i64: 3>, scalar_prefetch = 0 : i64, scratch_operands = 4 : i64, tpu.core_type = #tpu.core_type<tc>, window_params = [{pipeline_mode = #tpu.pipeline_mode<synchronous>, transform_indices = @transform_0, window_bounds = array<i64: 8, 256>}, {pipeline_mode = #tpu.pipeline_mode<synchronous>, transform_indices = @transform_1, window_bounds = array<i64: 256, 256>}, {pipeline_mode = #tpu.pipeline_mode<synchronous>, transform_indices = @transform_2, window_bounds = array<i64: 256, 128>}, {pipeline_mode = #tpu.pipeline_mode<synchronous>, transform_indices = @transform_3, window_bounds = array<i64: 1, 128>}, {pipeline_mode = #tpu.pipeline_mode<synchronous>, transform_indices = @transform_4, window_bounds = array<i64: 128, 128>}, {transform_indices = @transform_5, window_bounds = array<i64: 1, 8, 128>}]} {
    %c0_i32 = arith.constant 0 : i32
    %0 = arith.cmpi eq, %arg0, %c0_i32 : i32
    %1 = arith.extui %0 : i1 to i32
    %c0_i32_0 = arith.constant 0 : i32
    %2 = arith.cmpi ne, %1, %c0_i32_0 : i32
    scf.if %2 {
      %cst_37 = arith.constant 0.000000e+00 : f32
      %50 = vector.broadcast %cst_37 : f32 to vector<8x256xf32>
      %c0_38 = arith.constant 0 : index
      %c0_39 = arith.constant 0 : index
      %51 = vector.load %arg7[%c0_38, %c0_39] : memref<8x256xf32, #tpu.memory_space<vmem>>, vector<8x256xf32>
      tpu.vector_store %arg7[%c0_38, %c0_39], %50 {strides = array<i32>} : memref<8x256xf32, #tpu.memory_space<vmem>>, vector<8x256xf32>,
      %cst_40 = arith.constant 0.000000e+00 : f32
      %52 = vector.broadcast %cst_40 : f32 to vector<8x256xf32>
      %c0_41 = arith.constant 0 : index
      %c0_42 = arith.constant 0 : index
      %53 = vector.load %arg8[%c0_41, %c0_42] : memref<8x256xf32, #tpu.memory_space<vmem>>, vector<8x256xf32>
      tpu.vector_store %arg8[%c0_41, %c0_42], %52 {strides = array<i32>} : memref<8x256xf32, #tpu.memory_space<vmem>>, vector<8x256xf32>,
      %cst_43 = arith.constant 0.000000e+00 : f32
      %54 = vector.broadcast %cst_43 : f32 to vector<8x128xf32>
      %c0_44 = arith.constant 0 : index
      %c0_45 = arith.constant 0 : index
      %55 = vector.load %arg9[%c0_44, %c0_45] : memref<8x128xf32, #tpu.memory_space<vmem>>, vector<8x128xf32>
      tpu.vector_store %arg9[%c0_44, %c0_45], %54 {strides = array<i32>} : memref<8x128xf32, #tpu.memory_space<vmem>>, vector<8x128xf32>,
      %cst_46 = arith.constant 0.000000e+00 : f32
      %56 = vector.broadcast %cst_46 : f32 to vector<8x128xf32>
      %c0_47 = arith.constant 0 : index
      %c0_48 = arith.constant 0 : index
      %57 = vector.load %arg10[%c0_47, %c0_48] : memref<8x128xf32, #tpu.memory_space<vmem>>, vector<8x128xf32>
      tpu.vector_store %arg10[%c0_47, %c0_48], %56 {strides = array<i32>} : memref<8x128xf32, #tpu.memory_space<vmem>>, vector<8x128xf32>,
    } else {
    }
    %c0 = arith.constant 0 : index
    %c0_1 = arith.constant 0 : index
    %3 = vector.load %arg7[%c0, %c0_1] : memref<8x256xf32, #tpu.memory_space<vmem>>, vector<8x256xf32>
    %c0_2 = arith.constant 0 : index
    %c0_3 = arith.constant 0 : index
    %4 = vector.load %arg8[%c0_2, %c0_3] : memref<8x256xf32, #tpu.memory_space<vmem>>, vector<8x256xf32>
    %5 = arith.truncf %3 : vector<8x256xf32> to vector<8x256xbf16>
    %c0_4 = arith.constant 0 : index
    %c0_5 = arith.constant 0 : index
    %6 = vector.load %arg2[%c0_4, %c0_5] : memref<256x256xbf16, #tpu.memory_space<vmem>>, vector<256x256xbf16>
    %cst = arith.constant dense<0.000000e+00> : vector<8x256xf32>
    %7 = tpu.matmul %5, %6, %cst {dimension_numbers = #tpu.dot_dimension_numbers<[1], [0], [0], [1], [0, 0, 1, 1], [], []>} : vector<8x256xbf16>, vector<256x256xbf16>, vector<8x256xf32> -> vector<8x256xf32>
    %cst_6 = arith.constant 0.899999976 : f32
    %8 = vector.broadcast %cst_6 : f32 to vector<8x256xf32>
    %9 = arith.mulf %8, %4 : vector<8x256xf32>
    %c0_7 = arith.constant 0 : index
    %c0_8 = arith.constant 0 : index
    %10 = vector.load %arg1[%c0_7, %c0_8] : memref<8x256xf32, #tpu.memory_space<vmem>>, vector<8x256xf32>
    %11 = arith.addf %9, %10 : vector<8x256xf32>
    %12 = arith.addf %11, %7 : vector<8x256xf32>
    %cst_9 = arith.constant 1.000000e+00 : f32
    %13 = vector.broadcast %cst_9 : f32 to vector<8x256xf32>
    %14 = arith.mulf %3, %13 : vector<8x256xf32>
    %15 = arith.subf %12, %14 : vector<8x256xf32>
    %cst_10 = arith.constant 1.000000e+00 : f32
    %16 = vector.broadcast %cst_10 : f32 to vector<8x256xf32>
    %17 = arith.cmpf ogt, %15, %16 : vector<8x256xf32>
    %18 = arith.extui %17 : vector<8x256xi1> to vector<8x256xi32>
    %19 = arith.sitofp %18 : vector<8x256xi32> to vector<8x256xf32>
    %c0_11 = arith.constant 0 : index
    %c0_12 = arith.constant 0 : index
    %20 = vector.load %arg7[%c0_11, %c0_12] : memref<8x256xf32, #tpu.memory_space<vmem>>, vector<8x256xf32>
    tpu.vector_store %arg7[%c0_11, %c0_12], %19 {strides = array<i32>} : memref<8x256xf32, #tpu.memory_space<vmem>>, vector<8x256xf32>,
    %c0_13 = arith.constant 0 : index
    %c0_14 = arith.constant 0 : index
    %21 = vector.load %arg8[%c0_13, %c0_14] : memref<8x256xf32, #tpu.memory_space<vmem>>, vector<8x256xf32>
    tpu.vector_store %arg8[%c0_13, %c0_14], %15 {strides = array<i32>} : memref<8x256xf32, #tpu.memory_space<vmem>>, vector<8x256xf32>,
    %c0_15 = arith.constant 0 : index
    %c0_16 = arith.constant 0 : index
    %22 = vector.load %arg9[%c0_15, %c0_16] : memref<8x128xf32, #tpu.memory_space<vmem>>, vector<8x128xf32>
    %c0_17 = arith.constant 0 : index
    %c0_18 = arith.constant 0 : index
    %23 = vector.load %arg10[%c0_17, %c0_18] : memref<8x128xf32, #tpu.memory_space<vmem>>, vector<8x128xf32>
    %24 = arith.truncf %19 : vector<8x256xf32> to vector<8x256xbf16>
    %c0_19 = arith.constant 0 : index
    %c0_20 = arith.constant 0 : index
    %25 = vector.load %arg3[%c0_19, %c0_20] : memref<256x128xbf16, #tpu.memory_space<vmem>>, vector<256x128xbf16>
    %cst_21 = arith.constant dense<0.000000e+00> : vector<8x128xf32>
    %26 = tpu.matmul %24, %25, %cst_21 {dimension_numbers = #tpu.dot_dimension_numbers<[1], [0], [0], [1], [0, 0, 1, 1], [], []>} : vector<8x256xbf16>, vector<256x128xbf16>, vector<8x128xf32> -> vector<8x128xf32>
    %c0_22 = arith.constant 0 : index
    %c0_23 = arith.constant 0 : index
    %27 = vector.load %arg4[%c0_22, %c0_23] : memref<1x128xf32, #tpu.memory_space<vmem>>, vector<1x128xf32>
    %28 = vector.broadcast %27 : vector<1x128xf32> to vector<8x128xf32>
    %29 = arith.addf %26, %28 : vector<8x128xf32>
    %30 = arith.truncf %22 : vector<8x128xf32> to vector<8x128xbf16>
    %c0_24 = arith.constant 0 : index
    %c0_25 = arith.constant 0 : index
    %31 = vector.load %arg5[%c0_24, %c0_25] : memref<128x128xbf16, #tpu.memory_space<vmem>>, vector<128x128xbf16>
    %cst_26 = arith.constant dense<0.000000e+00> : vector<8x128xf32>
    %32 = tpu.matmul %30, %31, %cst_26 {dimension_numbers = #tpu.dot_dimension_numbers<[1], [0], [0], [1], [0, 0, 1, 1], [], []>} : vector<8x128xbf16>, vector<128x128xbf16>, vector<8x128xf32> -> vector<8x128xf32>
    %cst_27 = arith.constant 0.899999976 : f32
    %33 = vector.broadcast %cst_27 : f32 to vector<8x128xf32>
    %34 = arith.mulf %33, %23 : vector<8x128xf32>
    %35 = arith.addf %34, %29 : vector<8x128xf32>
    %36 = arith.addf %35, %32 : vector<8x128xf32>
    %cst_28 = arith.constant 1.000000e+00 : f32
    %37 = vector.broadcast %cst_28 : f32 to vector<8x128xf32>
    %38 = arith.mulf %22, %37 : vector<8x128xf32>
    %39 = arith.subf %36, %38 : vector<8x128xf32>
    %cst_29 = arith.constant 1.000000e+00 : f32
    %40 = vector.broadcast %cst_29 : f32 to vector<8x128xf32>
    %41 = arith.cmpf ogt, %39, %40 : vector<8x128xf32>
    %42 = arith.extui %41 : vector<8x128xi1> to vector<8x128xi32>
    %43 = arith.sitofp %42 : vector<8x128xi32> to vector<8x128xf32>
    %c0_30 = arith.constant 0 : index
    %c0_31 = arith.constant 0 : index
    %44 = vector.load %arg9[%c0_30, %c0_31] : memref<8x128xf32, #tpu.memory_space<vmem>>, vector<8x128xf32>
    tpu.vector_store %arg9[%c0_30, %c0_31], %43 {strides = array<i32>} : memref<8x128xf32, #tpu.memory_space<vmem>>, vector<8x128xf32>,
    %c0_32 = arith.constant 0 : index
    %c0_33 = arith.constant 0 : index
    %45 = vector.load %arg10[%c0_32, %c0_33] : memref<8x128xf32, #tpu.memory_space<vmem>>, vector<8x128xf32>
    tpu.vector_store %arg10[%c0_32, %c0_33], %39 {strides = array<i32>} : memref<8x128xf32, #tpu.memory_space<vmem>>, vector<8x128xf32>,
    %46 = arith.truncf %43 : vector<8x128xf32> to vector<8x128xbf16>
    %c0_34 = arith.constant 0 : index
    %c0_35 = arith.constant 0 : index
    %c0_36 = arith.constant 0 : index
    %47 = vector.load %arg6[%c0_34, %c0_35, %c0_36] : memref<1x8x128xbf16, #tpu.memory_space<vmem>>, vector<1x8x128xbf16>
    %48 = vector.shape_cast %47 : vector<1x8x128xbf16> to vector<8x128xbf16>
    %49 = vector.shape_cast %46 : vector<8x128xbf16> to vector<1x8x128xbf16>
    tpu.vector_store %arg6[%c0_34, %c0_35, %c0_36], %49 {strides = array<i32>} : memref<1x8x128xbf16, #tpu.memory_space<vmem>>, vector<1x8x128xbf16>,
    return
  }
  func.func @transform_0(%arg0: i32) -> (i32, i32) {
    %c0_i32 = arith.constant 0 : i32
    %c0_i32_0 = arith.constant 0 : i32
    %c0_i32_1 = arith.constant 0 : i32
    return %c0_i32, %c0_i32_0 : i32, i32
  }
  func.func @transform_1(%arg0: i32) -> (i32, i32) {
    %c0_i32 = arith.constant 0 : i32
    %c0_i32_0 = arith.constant 0 : i32
    %c0_i32_1 = arith.constant 0 : i32
    return %c0_i32, %c0_i32_0 : i32, i32
  }
  func.func @transform_2(%arg0: i32) -> (i32, i32) {
    %c0_i32 = arith.constant 0 : i32
    %c0_i32_0 = arith.constant 0 : i32
    %c0_i32_1 = arith.constant 0 : i32
    return %c0_i32, %c0_i32_0 : i32, i32
  }
  func.func @transform_3(%arg0: i32) -> (i32, i32) {
    %c0_i32 = arith.constant 0 : i32
    %c0_i32_0 = arith.constant 0 : i32
    %c0_i32_1 = arith.constant 0 : i32
    return %c0_i32, %c0_i32_0 : i32, i32
  }
  func.func @transform_4(%arg0: i32) -> (i32, i32) {
    %c0_i32 = arith.constant 0 : i32
    %c0_i32_0 = arith.constant 0 : i32
    %c0_i32_1 = arith.constant 0 : i32
    return %c0_i32, %c0_i32_0 : i32, i32
  }
  func.func @transform_5(%arg0: i32) -> (i32, i32, i32) {
    %c0_i32 = arith.constant 0 : i32
    %c0_i32_0 = arith.constant 0 : i32
    %c0_i32_1 = arith.constant 0 : i32
    return %arg0, %c0_i32, %c0_i32_0 : i32, i32, i32
  }
}

module attributes {stable_mosaic.version = 11 : i64} {
  func.func @_mlp_kernel(%arg0: i32, %arg1: memref<8x512xbf16, #tpu.memory_space<vmem>>, %arg2: memref<512x256xbf16, #tpu.memory_space<vmem>>, %arg3: memref<1x256xf32, #tpu.memory_space<vmem>>, %arg4: memref<256x128xbf16, #tpu.memory_space<vmem>>, %arg5: memref<1x128xf32, #tpu.memory_space<vmem>>, %arg6: memref<128x128xbf16, #tpu.memory_space<vmem>>, %arg7: memref<1x128xf32, #tpu.memory_space<vmem>>, %arg8: memref<128x32xbf16, #tpu.memory_space<vmem>>, %arg9: memref<1x32xf32, #tpu.memory_space<vmem>>, %arg10: memref<32x16xbf16, #tpu.memory_space<vmem>>, %arg11: memref<1x16xf32, #tpu.memory_space<vmem>>, %arg12: memref<16x2xbf16, #tpu.memory_space<vmem>>, %arg13: memref<1x2xf32, #tpu.memory_space<vmem>>, %arg14: memref<8x2xf32, #tpu.memory_space<vmem>>) attributes {dimension_semantics = [#tpu.dimension_semantics<parallel>], iteration_bounds = array<i64: 1>, scalar_prefetch = 0 : i64, scratch_operands = 0 : i64, tpu.core_type = #tpu.core_type<tc>, window_params = [{transform_indices = @transform_0, window_bounds = array<i64: 8, 512>}, {pipeline_mode = #tpu.pipeline_mode<synchronous>, transform_indices = @transform_1, window_bounds = array<i64: 512, 256>}, {pipeline_mode = #tpu.pipeline_mode<synchronous>, transform_indices = @transform_2, window_bounds = array<i64: 1, 256>}, {pipeline_mode = #tpu.pipeline_mode<synchronous>, transform_indices = @transform_3, window_bounds = array<i64: 256, 128>}, {pipeline_mode = #tpu.pipeline_mode<synchronous>, transform_indices = @transform_4, window_bounds = array<i64: 1, 128>}, {pipeline_mode = #tpu.pipeline_mode<synchronous>, transform_indices = @transform_5, window_bounds = array<i64: 128, 128>}, {pipeline_mode = #tpu.pipeline_mode<synchronous>, transform_indices = @transform_6, window_bounds = array<i64: 1, 128>}, {pipeline_mode = #tpu.pipeline_mode<synchronous>, transform_indices = @transform_7, window_bounds = array<i64: 128, 32>}, {pipeline_mode = #tpu.pipeline_mode<synchronous>, transform_indices = @transform_8, window_bounds = array<i64: 1, 32>}, {pipeline_mode = #tpu.pipeline_mode<synchronous>, transform_indices = @transform_9, window_bounds = array<i64: 32, 16>}, {pipeline_mode = #tpu.pipeline_mode<synchronous>, transform_indices = @transform_10, window_bounds = array<i64: 1, 16>}, {pipeline_mode = #tpu.pipeline_mode<synchronous>, transform_indices = @transform_11, window_bounds = array<i64: 16, 2>}, {pipeline_mode = #tpu.pipeline_mode<synchronous>, transform_indices = @transform_12, window_bounds = array<i64: 1, 2>}, {transform_indices = @transform_13, window_bounds = array<i64: 8, 2>}]} {
    %c0 = arith.constant 0 : index
    %c0_0 = arith.constant 0 : index
    %0 = vector.load %arg1[%c0, %c0_0] : memref<8x512xbf16, #tpu.memory_space<vmem>>, vector<8x512xbf16>
    %c0_1 = arith.constant 0 : index
    %c0_2 = arith.constant 0 : index
    %1 = vector.load %arg2[%c0_1, %c0_2] : memref<512x256xbf16, #tpu.memory_space<vmem>>, vector<512x256xbf16>
    %cst = arith.constant dense<0.000000e+00> : vector<8x256xf32>
    %2 = tpu.matmul %0, %1, %cst {dimension_numbers = #tpu.dot_dimension_numbers<[1], [0], [0], [1], [0, 0, 1, 1], [], []>} : vector<8x512xbf16>, vector<512x256xbf16>, vector<8x256xf32> -> vector<8x256xf32>
    %c0_3 = arith.constant 0 : index
    %c0_4 = arith.constant 0 : index
    %3 = vector.load %arg3[%c0_3, %c0_4] : memref<1x256xf32, #tpu.memory_space<vmem>>, vector<1x256xf32>
    %4 = vector.broadcast %3 : vector<1x256xf32> to vector<8x256xf32>
    %5 = arith.addf %2, %4 : vector<8x256xf32>
    %cst_5 = arith.constant 0.000000e+00 : f32
    %6 = vector.broadcast %cst_5 : f32 to vector<8x256xf32>
    %7 = arith.maximumf %5, %6 : vector<8x256xf32>
    %8 = arith.truncf %7 : vector<8x256xf32> to vector<8x256xbf16>
    %c0_6 = arith.constant 0 : index
    %c0_7 = arith.constant 0 : index
    %9 = vector.load %arg4[%c0_6, %c0_7] : memref<256x128xbf16, #tpu.memory_space<vmem>>, vector<256x128xbf16>
    %cst_8 = arith.constant dense<0.000000e+00> : vector<8x128xf32>
    %10 = tpu.matmul %8, %9, %cst_8 {dimension_numbers = #tpu.dot_dimension_numbers<[1], [0], [0], [1], [0, 0, 1, 1], [], []>} : vector<8x256xbf16>, vector<256x128xbf16>, vector<8x128xf32> -> vector<8x128xf32>
    %c0_9 = arith.constant 0 : index
    %c0_10 = arith.constant 0 : index
    %11 = vector.load %arg5[%c0_9, %c0_10] : memref<1x128xf32, #tpu.memory_space<vmem>>, vector<1x128xf32>
    %12 = vector.broadcast %11 : vector<1x128xf32> to vector<8x128xf32>
    %13 = arith.addf %10, %12 : vector<8x128xf32>
    %cst_11 = arith.constant 0.000000e+00 : f32
    %14 = vector.broadcast %cst_11 : f32 to vector<8x128xf32>
    %15 = arith.maximumf %13, %14 : vector<8x128xf32>
    %16 = arith.truncf %15 : vector<8x128xf32> to vector<8x128xbf16>
    %c0_12 = arith.constant 0 : index
    %c0_13 = arith.constant 0 : index
    %17 = vector.load %arg6[%c0_12, %c0_13] : memref<128x128xbf16, #tpu.memory_space<vmem>>, vector<128x128xbf16>
    %cst_14 = arith.constant dense<0.000000e+00> : vector<8x128xf32>
    %18 = tpu.matmul %16, %17, %cst_14 {dimension_numbers = #tpu.dot_dimension_numbers<[1], [0], [0], [1], [0, 0, 1, 1], [], []>} : vector<8x128xbf16>, vector<128x128xbf16>, vector<8x128xf32> -> vector<8x128xf32>
    %c0_15 = arith.constant 0 : index
    %c0_16 = arith.constant 0 : index
    %19 = vector.load %arg7[%c0_15, %c0_16] : memref<1x128xf32, #tpu.memory_space<vmem>>, vector<1x128xf32>
    %20 = vector.broadcast %19 : vector<1x128xf32> to vector<8x128xf32>
    %21 = arith.addf %18, %20 : vector<8x128xf32>
    %cst_17 = arith.constant 0.000000e+00 : f32
    %22 = vector.broadcast %cst_17 : f32 to vector<8x128xf32>
    %23 = arith.maximumf %21, %22 : vector<8x128xf32>
    %24 = arith.truncf %23 : vector<8x128xf32> to vector<8x128xbf16>
    %c0_18 = arith.constant 0 : index
    %c0_19 = arith.constant 0 : index
    %25 = vector.load %arg8[%c0_18, %c0_19] : memref<128x32xbf16, #tpu.memory_space<vmem>>, vector<128x32xbf16>
    %cst_20 = arith.constant dense<0.000000e+00> : vector<8x32xf32>
    %26 = tpu.matmul %24, %25, %cst_20 {dimension_numbers = #tpu.dot_dimension_numbers<[1], [0], [0], [1], [0, 0, 1, 1], [], []>} : vector<8x128xbf16>, vector<128x32xbf16>, vector<8x32xf32> -> vector<8x32xf32>
    %c0_21 = arith.constant 0 : index
    %c0_22 = arith.constant 0 : index
    %27 = vector.load %arg9[%c0_21, %c0_22] : memref<1x32xf32, #tpu.memory_space<vmem>>, vector<1x32xf32>
    %28 = vector.broadcast %27 : vector<1x32xf32> to vector<8x32xf32>
    %29 = arith.addf %26, %28 : vector<8x32xf32>
    %cst_23 = arith.constant 0.000000e+00 : f32
    %30 = vector.broadcast %cst_23 : f32 to vector<8x32xf32>
    %31 = arith.maximumf %29, %30 : vector<8x32xf32>
    %32 = arith.truncf %31 : vector<8x32xf32> to vector<8x32xbf16>
    %c0_24 = arith.constant 0 : index
    %c0_25 = arith.constant 0 : index
    %33 = vector.load %arg10[%c0_24, %c0_25] : memref<32x16xbf16, #tpu.memory_space<vmem>>, vector<32x16xbf16>
    %cst_26 = arith.constant dense<0.000000e+00> : vector<8x16xf32>
    %34 = tpu.matmul %32, %33, %cst_26 {dimension_numbers = #tpu.dot_dimension_numbers<[1], [0], [0], [1], [0, 0, 1, 1], [], []>} : vector<8x32xbf16>, vector<32x16xbf16>, vector<8x16xf32> -> vector<8x16xf32>
    %c0_27 = arith.constant 0 : index
    %c0_28 = arith.constant 0 : index
    %35 = vector.load %arg11[%c0_27, %c0_28] : memref<1x16xf32, #tpu.memory_space<vmem>>, vector<1x16xf32>
    %36 = vector.broadcast %35 : vector<1x16xf32> to vector<8x16xf32>
    %37 = arith.addf %34, %36 : vector<8x16xf32>
    %cst_29 = arith.constant 0.000000e+00 : f32
    %38 = vector.broadcast %cst_29 : f32 to vector<8x16xf32>
    %39 = arith.maximumf %37, %38 : vector<8x16xf32>
    %40 = arith.truncf %39 : vector<8x16xf32> to vector<8x16xbf16>
    %c0_30 = arith.constant 0 : index
    %c0_31 = arith.constant 0 : index
    %41 = vector.load %arg12[%c0_30, %c0_31] : memref<16x2xbf16, #tpu.memory_space<vmem>>, vector<16x2xbf16>
    %cst_32 = arith.constant dense<0.000000e+00> : vector<8x2xf32>
    %42 = tpu.matmul %40, %41, %cst_32 {dimension_numbers = #tpu.dot_dimension_numbers<[1], [0], [0], [1], [0, 0, 1, 1], [], []>} : vector<8x16xbf16>, vector<16x2xbf16>, vector<8x2xf32> -> vector<8x2xf32>
    %c0_33 = arith.constant 0 : index
    %c0_34 = arith.constant 0 : index
    %43 = vector.load %arg13[%c0_33, %c0_34] : memref<1x2xf32, #tpu.memory_space<vmem>>, vector<1x2xf32>
    %44 = vector.broadcast %43 : vector<1x2xf32> to vector<8x2xf32>
    %45 = arith.addf %42, %44 : vector<8x2xf32>
    %c0_35 = arith.constant 0 : index
    %c0_36 = arith.constant 0 : index
    %46 = vector.load %arg14[%c0_35, %c0_36] : memref<8x2xf32, #tpu.memory_space<vmem>>, vector<8x2xf32>
    tpu.vector_store %arg14[%c0_35, %c0_36], %45 {strides = array<i32>} : memref<8x2xf32, #tpu.memory_space<vmem>>, vector<8x2xf32>,
    return
  }
  func.func @transform_0(%arg0: i32) -> (i32, i32) {
    %c0_i32 = arith.constant 0 : i32
    %c0_i32_0 = arith.constant 0 : i32
    return %arg0, %c0_i32 : i32, i32
  }
  func.func @transform_1(%arg0: i32) -> (i32, i32) {
    %c0_i32 = arith.constant 0 : i32
    %c0_i32_0 = arith.constant 0 : i32
    %c0_i32_1 = arith.constant 0 : i32
    return %c0_i32, %c0_i32_0 : i32, i32
  }
  func.func @transform_2(%arg0: i32) -> (i32, i32) {
    %c0_i32 = arith.constant 0 : i32
    %c0_i32_0 = arith.constant 0 : i32
    %c0_i32_1 = arith.constant 0 : i32
    return %c0_i32, %c0_i32_0 : i32, i32
  }
  func.func @transform_3(%arg0: i32) -> (i32, i32) {
    %c0_i32 = arith.constant 0 : i32
    %c0_i32_0 = arith.constant 0 : i32
    %c0_i32_1 = arith.constant 0 : i32
    return %c0_i32, %c0_i32_0 : i32, i32
  }
  func.func @transform_4(%arg0: i32) -> (i32, i32) {
    %c0_i32 = arith.constant 0 : i32
    %c0_i32_0 = arith.constant 0 : i32
    %c0_i32_1 = arith.constant 0 : i32
    return %c0_i32, %c0_i32_0 : i32, i32
  }
  func.func @transform_5(%arg0: i32) -> (i32, i32) {
    %c0_i32 = arith.constant 0 : i32
    %c0_i32_0 = arith.constant 0 : i32
    %c0_i32_1 = arith.constant 0 : i32
    return %c0_i32, %c0_i32_0 : i32, i32
  }
  func.func @transform_6(%arg0: i32) -> (i32, i32) {
    %c0_i32 = arith.constant 0 : i32
    %c0_i32_0 = arith.constant 0 : i32
    %c0_i32_1 = arith.constant 0 : i32
    return %c0_i32, %c0_i32_0 : i32, i32
  }
  func.func @transform_7(%arg0: i32) -> (i32, i32) {
    %c0_i32 = arith.constant 0 : i32
    %c0_i32_0 = arith.constant 0 : i32
    %c0_i32_1 = arith.constant 0 : i32
    return %c0_i32, %c0_i32_0 : i32, i32
  }
  func.func @transform_8(%arg0: i32) -> (i32, i32) {
    %c0_i32 = arith.constant 0 : i32
    %c0_i32_0 = arith.constant 0 : i32
    %c0_i32_1 = arith.constant 0 : i32
    return %c0_i32, %c0_i32_0 : i32, i32
  }
  func.func @transform_9(%arg0: i32) -> (i32, i32) {
    %c0_i32 = arith.constant 0 : i32
    %c0_i32_0 = arith.constant 0 : i32
    %c0_i32_1 = arith.constant 0 : i32
    return %c0_i32, %c0_i32_0 : i32, i32
  }
  func.func @transform_10(%arg0: i32) -> (i32, i32) {
    %c0_i32 = arith.constant 0 : i32
    %c0_i32_0 = arith.constant 0 : i32
    %c0_i32_1 = arith.constant 0 : i32
    return %c0_i32, %c0_i32_0 : i32, i32
  }
  func.func @transform_11(%arg0: i32) -> (i32, i32) {
    %c0_i32 = arith.constant 0 : i32
    %c0_i32_0 = arith.constant 0 : i32
    %c0_i32_1 = arith.constant 0 : i32
    return %c0_i32, %c0_i32_0 : i32, i32
  }
  func.func @transform_12(%arg0: i32) -> (i32, i32) {
    %c0_i32 = arith.constant 0 : i32
    %c0_i32_0 = arith.constant 0 : i32
    %c0_i32_1 = arith.constant 0 : i32
    return %c0_i32, %c0_i32_0 : i32, i32
  }
  func.func @transform_13(%arg0: i32) -> (i32, i32) {
    %c0_i32 = arith.constant 0 : i32
    %c0_i32_0 = arith.constant 0 : i32
    return %arg0, %c0_i32 : i32, i32
  }
}

</mosaic_0001>

<llo_original>
// kernel: net_forward.3
$region0: #{net_forward.3}
  #allocation0 [shape = 'u32[]', space=smem, size = 0x4, offset = 0x4, fixed_abs, tag = 'smem constant byte address 0x4 - core index']
  #allocation1 [shape = 'u32[144,128]{1,0:T(1,128)}', space=vmem, size = 0x12000, scoped, tag = 'internal scratch']
  %s0 = inlined_call_operand.vmem [shape: bf16[8,256], index: 0, kind: input, shape index: {}]
  %s1 = inlined_call_operand.vmem [shape: bf16[256,256], index: 1, kind: input, shape index: {}]
  %s2 = inlined_call_operand.vmem [shape: f32[1,256], index: 2, kind: input, shape index: {}]
  %s3 = inlined_call_operand.vmem [shape: f32[8,256], index: 3, kind: output, shape index: {}]
  %s4 = sld [smem:[#allocation0]]
  $region26: #{net_forward.3} parent=0
    _
  %s6 = ssub.s32 1, %s4
  %s7 = scalar_select 0, %s6, %s4
  // Predicated region
  $region2: #{net_forward.3} parent=0 // pred_check
    _
  $region3: #{net_forward.3} parent=0 // pred_check_branch
    %9 = sbr.rel (0) target = $region5
  $region4: #{net_forward.3} parent=0 // pred_region
    _
  $region5: #{net_forward.3} parent=0 // pred_fallthru
    _
  // Predicated region
  $region6: #{net_forward.3} parent=0 // pred_check
    _
  $region7: #{net_forward.3} parent=0 // pred_check_branch
    %11 = sbr.rel (0) target = $region9
  $region8: #{net_forward.3} parent=0 // pred_region
    _
  $region9: #{net_forward.3} parent=0 // pred_fallthru
    _
  // Predicated region
  $region10: #{net_forward.3} parent=0 // pred_check
    _
  $region11: #{net_forward.3} parent=0 // pred_check_branch
    %13 = sbr.rel (0) target = $region13
  $region12: #{net_forward.3} parent=0 // pred_region
    _
  $region13: #{net_forward.3} parent=0 // pred_fallthru
    _
  %p14 = scmp.eq.s32.totalorder 0, 0
  // Predicated region
  $region14: #{net_forward.3} parent=0 // pred_check
    %p15 = pneg %p14
  $region15: #{net_forward.3} parent=0 // pred_check_branch
    %17 = sbr.rel (%p15) target = $region17
  $region16: #{net_forward.3} parent=0 // pred_region
    %v18 = vld [vmem:[%s2] sm:$0x3]
    %v20 = vlaneseq
    %v21 = vshrl.u32 %v20, 7
    %v22 = vsub.s32 0, %v21
    %v23 = vrot.slane %v18, %v22
    %v24 = vlaneseq
    %v25 = vshrl.u32 %v24, 7
    %v26 = vsub.s32 1, %v25
    %v27 = vrot.slane %v18, %v26
    %30 = vst [vmem:[%s3] sm:$0xff] %v23
    %31 = vst [vmem:[%s3 + $0x8] sm:$0xff] %v27
  $region17: #{net_forward.3} parent=0 // pred_fallthru
    _
  %v32 = vld [vmem:[%s3] sm:$0xff]
  %v33 = vld [vmem:[%s3 + $0x8] sm:$0xff]
  %v34 = vld [vmem:[%s0] sm:$0xff]
  %v35 = vld [vmem:[%s1] sm:$0xff]
  %v36 = vld [vmem:[%s1 + $0x8] sm:$0xff]
  %v37 = vld [vmem:[%s1 + $0x10] sm:$0xff]
  %v38 = vld [vmem:[%s1 + $0x18] sm:$0xff]
  %v39 = vld [vmem:[%s1 + $0x20] sm:$0xff]
  %v40 = vld [vmem:[%s1 + $0x28] sm:$0xff]
  %v41 = vld [vmem:[%s1 + $0x30] sm:$0xff]
  %v42 = vld [vmem:[%s1 + $0x38] sm:$0xff]
  %v43 = vld [vmem:[%s1 + $0x40] sm:$0xff]
  %v44 = vld [vmem:[%s1 + $0x48] sm:$0xff]
  %v45 = vld [vmem:[%s1 + $0x50] sm:$0xff]
  %v46 = vld [vmem:[%s1 + $0x58] sm:$0xff]
  %v47 = vld [vmem:[%s1 + $0x60] sm:$0xff]
  %v48 = vld [vmem:[%s1 + $0x68] sm:$0xff]
  %v49 = vld [vmem:[%s1 + $0x70] sm:$0xff]
  %v50 = vld [vmem:[%s1 + $0x78] sm:$0xff]
  %v51 = vld [vmem:[%s1 + $0x80] sm:$0xff]
  %v52 = vld [vmem:[%s1 + $0x88] sm:$0xff]
  %v53 = vld [vmem:[%s1 + $0x90] sm:$0xff]
  %v54 = vld [vmem:[%s1 + $0x98] sm:$0xff]
  %v55 = vld [vmem:[%s1 + $0xa0] sm:$0xff]
  %v56 = vld [vmem:[%s1 + $0xa8] sm:$0xff]
  %v57 = vld [vmem:[%s1 + $0xb0] sm:$0xff]
  %v58 = vld [vmem:[%s1 + $0xb8] sm:$0xff]
  %v59 = vld [vmem:[%s1 + $0xc0] sm:$0xff]
  %v60 = vld [vmem:[%s1 + $0xc8] sm:$0xff]
  %v61 = vld [vmem:[%s1 + $0xd0] sm:$0xff]
  %v62 = vld [vmem:[%s1 + $0xd8] sm:$0xff]
  %v63 = vld [vmem:[%s1 + $0xe0] sm:$0xff]
  %v64 = vld [vmem:[%s1 + $0xe8] sm:$0xff]
  %v65 = vld [vmem:[%s1 + $0xf0] sm:$0xff]
  %v66 = vld [vmem:[%s1 + $0xf8] sm:$0xff]
  %v68 = vunpack.c.l.b16 %v34
  %v69 = vunpack.c.h.b16 %v34
  %v70 = vpack.c.b16 %v68, %v68
  %v71 = vpack.c.b16 %v69, %v69
  %v106 = vunpack.c.l.b16 %v35
  %v107 = vunpack.c.h.b16 %v35
  %v108 = vunpack.c.l.b16 %v36
  %v109 = vunpack.c.h.b16 %v36
  %v110 = vunpack.c.l.b16 %v37
  %v111 = vunpack.c.h.b16 %v37
  %v112 = vunpack.c.l.b16 %v38
  %v113 = vunpack.c.h.b16 %v38
  %v114 = vunpack.c.l.b16 %v39
  %v115 = vunpack.c.h.b16 %v39
  %v116 = vunpack.c.l.b16 %v40
  %v117 = vunpack.c.h.b16 %v40
  %v118 = vunpack.c.l.b16 %v41
  %v119 = vunpack.c.h.b16 %v41
  %v120 = vunpack.c.l.b16 %v42
  %v121 = vunpack.c.h.b16 %v42
  %v122 = vunpack.c.l.b16 %v43
  %v123 = vunpack.c.h.b16 %v43
  %v124 = vunpack.c.l.b16 %v44
  %v125 = vunpack.c.h.b16 %v44
  %v126 = vunpack.c.l.b16 %v45
  %v127 = vunpack.c.h.b16 %v45
  %v128 = vunpack.c.l.b16 %v46
  %v129 = vunpack.c.h.b16 %v46
  %v130 = vunpack.c.l.b16 %v47
  %v131 = vunpack.c.h.b16 %v47
  %v132 = vunpack.c.l.b16 %v48
  %v133 = vunpack.c.h.b16 %v48
  %v134 = vunpack.c.l.b16 %v49
  %v135 = vunpack.c.h.b16 %v49
  %v136 = vunpack.c.l.b16 %v50
  %v137 = vunpack.c.h.b16 %v50
  %v138 = vunpack.c.l.b16 %v51
  %v139 = vunpack.c.h.b16 %v51
  %v140 = vunpack.c.l.b16 %v52
  %v141 = vunpack.c.h.b16 %v52
  %v142 = vunpack.c.l.b16 %v53
  %v143 = vunpack.c.h.b16 %v53
  %v144 = vunpack.c.l.b16 %v54
  %v145 = vunpack.c.h.b16 %v54
  %v146 = vunpack.c.l.b16 %v55
  %v147 = vunpack.c.h.b16 %v55
  %v148 = vunpack.c.l.b16 %v56
  %v149 = vunpack.c.h.b16 %v56
  %v150 = vunpack.c.l.b16 %v57
  %v151 = vunpack.c.h.b16 %v57
  %v152 = vunpack.c.l.b16 %v58
  %v153 = vunpack.c.h.b16 %v58
  %v154 = vunpack.c.l.b16 %v59
  %v155 = vunpack.c.h.b16 %v59
  %v156 = vunpack.c.l.b16 %v60
  %v157 = vunpack.c.h.b16 %v60
  %v158 = vunpack.c.l.b16 %v61
  %v159 = vunpack.c.h.b16 %v61
  %v160 = vunpack.c.l.b16 %v62
  %v161 = vunpack.c.h.b16 %v62
  %v162 = vunpack.c.l.b16 %v63
  %v163 = vunpack.c.h.b16 %v63
  %v164 = vunpack.c.l.b16 %v64
  %v165 = vunpack.c.h.b16 %v64
  %v166 = vunpack.c.l.b16 %v65
  %v167 = vunpack.c.h.b16 %v65
  %v168 = vunpack.c.l.b16 %v66
  %v169 = vunpack.c.h.b16 %v66
  %v170 = vpack.c.b16 %v108, %v106
  %v171 = vpack.c.b16 %v109, %v107
  %v172 = vpack.c.b16 %v112, %v110
  %v173 = vpack.c.b16 %v113, %v111
  %v174 = vpack.c.b16 %v116, %v114
  %v175 = vpack.c.b16 %v117, %v115
  %v176 = vpack.c.b16 %v120, %v118
  %v177 = vpack.c.b16 %v121, %v119
  %v178 = vpack.c.b16 %v124, %v122
  %v179 = vpack.c.b16 %v125, %v123
  %v180 = vpack.c.b16 %v128, %v126
  %v181 = vpack.c.b16 %v129, %v127
  %v182 = vpack.c.b16 %v132, %v130
  %v183 = vpack.c.b16 %v133, %v131
  %v184 = vpack.c.b16 %v136, %v134
  %v185 = vpack.c.b16 %v137, %v135
  %v186 = vpack.c.b16 %v140, %v138
  %v187 = vpack.c.b16 %v141, %v139
  %v188 = vpack.c.b16 %v144, %v142
  %v189 = vpack.c.b16 %v145, %v143
  %v190 = vpack.c.b16 %v148, %v146
  %v191 = vpack.c.b16 %v149, %v147
  %v192 = vpack.c.b16 %v152, %v150
  %v193 = vpack.c.b16 %v153, %v151
  %v194 = vpack.c.b16 %v156, %v154
  %v195 = vpack.c.b16 %v157, %v155
  %v196 = vpack.c.b16 %v160, %v158
  %v197 = vpack.c.b16 %v161, %v159
  %v198 = vpack.c.b16 %v164, %v162
  %v199 = vpack.c.b16 %v165, %v163
  %v200 = vpack.c.b16 %v168, %v166
  %v201 = vpack.c.b16 %v169, %v167
  %234 = vmatprep.subr.bf16.mxu0 %v171
  %235 = vmatpush1.bf16.msra.mxu0 %v170
  %236 = vmatprep.subr.bf16.mxu0 %v173
  %237 = vmatpush1.bf16.msra.mxu0 %v172
  %238 = vmatprep.subr.bf16.mxu0 %v175
  %239 = vmatpush1.bf16.msra.mxu0 %v174
  %240 = vmatprep.subr.bf16.mxu0 %v177
  %241 = vmatpush1.bf16.msra.mxu0 %v176
  %242 = vmatprep.subr.bf16.mxu0 %v179
  %243 = vmatpush1.bf16.msra.mxu0 %v178
  %244 = vmatprep.subr.bf16.mxu0 %v181
  %245 = vmatpush1.bf16.msra.mxu0 %v180
  %246 = vmatprep.subr.bf16.mxu0 %v183
  %247 = vmatpush1.bf16.msra.mxu0 %v182
  %248 = vmatprep.subr.bf16.mxu0 %v185
  %249 = vmatpush1.bf16.msra.mxu0 %v184
  %250 = vmatprep.subr.bf16.mxu0 %v187
  %251 = vmatpush1.bf16.msra.mxu0 %v186
  %252 = vmatprep.subr.bf16.mxu0 %v189
  %253 = vmatpush1.bf16.msra.mxu0 %v188
  %254 = vmatprep.subr.bf16.mxu0 %v191
  %255 = vmatpush1.bf16.msra.mxu0 %v190
  %256 = vmatprep.subr.bf16.mxu0 %v193
  %257 = vmatpush1.bf16.msra.mxu0 %v192
  %258 = vmatprep.subr.bf16.mxu0 %v195
  %259 = vmatpush1.bf16.msra.mxu0 %v194
  %260 = vmatprep.subr.bf16.mxu0 %v197
  %261 = vmatpush1.bf16.msra.mxu0 %v196
  %262 = vmatprep.subr.bf16.mxu0 %v199
  %263 = vmatpush1.bf16.msra.mxu0 %v198
  %264 = vmatprep.subr.bf16.mxu0 %v201
  %265 = vmatpush1.bf16.msra.mxu0 %v200
  %266 = vmatprep.mubr.bf16.mxu0 %v71
  %267 = vmatmul.mubr.bf16.gmra.mrb[0].mxu0 %v70
  %v268 = vpop.f32.mrb[0].mxu0
  %v269 = vadd.f32 0.0, %v268
  %v270 = vpop.f32.mrb[0].mxu0
  %v271 = vadd.f32 0.0, %v270
  %v272 = vpop.f32.mrb[0].mxu0
  %v273 = vpop.f32.mrb[0].mxu0
  %274 = vdwg.mxu0
  %v275 = vadd.f32 %v32, %v269
  %v276 = vadd.f32 %v33, %v271
  %277 = vst [vmem:[%s3] sm:$0xff] %v275
  %278 = vst [vmem:[%s3 + $0x8] sm:$0xff] %v276
  // Predicated region
  $region18: #{net_forward.3} parent=0 // pred_check
    _
  $region19: #{net_forward.3} parent=0 // pred_check_branch
    %280 = sbr.rel (0) target = $region21
  $region20: #{net_forward.3} parent=0 // pred_region
    _
  $region21: #{net_forward.3} parent=0 // pred_fallthru
    _
  // Predicated region
  $region22: #{net_forward.3} parent=0 // pred_check
    _
  $region23: #{net_forward.3} parent=0 // pred_check_branch
    %282 = sbr.rel (0) target = $region25
  $region24: #{net_forward.3} parent=0 // pred_region
    _
  $region25: #{net_forward.3} parent=0 // pred_fallthru
    _

// kernel: net_forward.4
$region0: #{net_forward.4}
  #allocation0 [shape = 'u32[]', space=smem, size = 0x4, offset = 0x4, fixed_abs, tag = 'smem constant byte address 0x4 - core index']
  #allocation1 [shape = 'u32[144,128]{1,0:T(1,128)}', space=vmem, size = 0x12000, scoped, tag = 'internal scratch']
  #allocation2 [shape = 'f32[8,256]{1,0:T(8,128)}', space=vmem, size = 0x2000, scoped, tag = 'scratch operand']
  #allocation3 [shape = 'f32[8,256]{1,0:T(8,128)}', space=vmem, size = 0x2000, scoped, tag = 'scratch operand']
  #allocation4 [shape = 'f32[8,128]{1,0:T(8,128)}', space=vmem, size = 0x1000, scoped, tag = 'scratch operand']
  #allocation5 [shape = 'f32[8,128]{1,0:T(8,128)}', space=vmem, size = 0x1000, scoped, tag = 'scratch operand']
  %s0 = inlined_call_operand.vmem [shape: f32[8,256], index: 0, kind: input, shape index: {}]
  %s1 = inlined_call_operand.vmem [shape: bf16[256,256], index: 1, kind: input, shape index: {}]
  %s2 = inlined_call_operand.hbm [shape: bf16[256,128], index: 2, kind: input, shape index: {}]
  %s3 = inlined_call_operand.vmem [shape: f32[1,128], index: 3, kind: input, shape index: {}]
  %s4 = inlined_call_operand.vmem [shape: bf16[128,128], index: 4, kind: input, shape index: {}]
  %s5 = inlined_call_operand.vmem [shape: bf16[3,8,128], index: 5, kind: output, shape index: {}]
  %s6 = sld [smem:[#allocation0]]
  $region61: #{net_forward.4} parent=0
    _
  %s8 = ssub.s32 1, %s6
  %s9 = scalar_select 0, %s8, %s6
  $region1: #{net_forward.4} parent=0
    #allocation6 [shape = 'u8[65536]{0}', space=vmem, size = 0x10000, scoped, tag = 'input window, operand 2, single buffered']
    #allocation7 [shape = 's32[2]{0}', space=sflag, size = 0x8, scoped, tag = 'scoped memory for net_forward.4']
    %10 = vsyncpa [#allocation7], 0
    loop: start=0, step=1, limit=5
    $region2: #{net_forward.4} parent=1 // loop_pre_header
      _
    $region3: #{net_forward.4} parent=1 // loop_header
      %s12 = sphi 0, %s16
      %p13 = scmp.ge.s32.totalorder %s12, 5
      %s20 = sphi 0, %s20
      %s22 = sphi 0, %s20
      %s23 = sphi 0, %s22
      %s37 = sphi 0, %s23
      %s41 = sphi 0, %s41
      %s43 = sphi 0, %s41
      %s44 = sphi 0, %s43
      %s58 = sphi 0, %s44
      %s62 = sphi 0, %s62
      %s64 = sphi 0, %s62
      %s65 = sphi 0, %s64
      %s79 = sphi 0, %s65
      %s83 = sphi 0, %s83
      %s85 = sphi 0, %s83
      %s86 = sphi 0, %s85
      %s100 = sphi 0, %s86
      %s104 = sphi 0, %s104
      %s106 = sphi 0, %s104
      %s107 = sphi 0, %s106
      %s121 = sphi 0, %s107
      %s127 = sphi 0, %s129
      %s130 = sphi 0, %s127
      %s131 = sphi 0, %s130
      %s147 = sphi 0, %s131
    $region4: #{net_forward.4} parent=1 // loop_header_branch
      %15 = sbr.rel (%p13) target = $region8
    $region5: #{net_forward.4} parent=1 // loop_body
      %s17 = ssub.s32 %s12, 1
      %s18 = ssub.s32 %s12, 2
      %s19 = sadd.s32 %s12, 1
      %s21 = sadd.s32 %s20, 1
      %p24 = scmp.eq.s32.totalorder %s12, 2
      %p25 = scmp.ne.s32.totalorder %s20, %s22
      %p26 = scmp.eq.s32.totalorder %s12, 0
      %p27 = por %p25, %p26
      %p28 = scmp.ne.s32.totalorder %s20, %s22
      %p29 = scmp.eq.s32.totalorder %s17, 2
      %p30 = por %p28, %p29
      %p31 = scmp.ne.s32.totalorder %s22, %s23
      %p32 = scmp.eq.s32.totalorder %s17, 0
      %p33 = por %p31, %p32
      %p34 = scmp.ne.s32.totalorder %s22, %s23
      %p35 = scmp.eq.s32.totalorder %s18, 2
      %p36 = por %p34, %p35
      %p38 = scmp.ne.s32.totalorder %s23, %s37
      %p39 = scmp.eq.s32.totalorder %s18, 0
      %p40 = por %p38, %p39
      %s42 = sadd.s32 %s41, 1
      %p45 = scmp.eq.s32.totalorder %s12, 2
      %p46 = scmp.ne.s32.totalorder %s41, %s43
      %p47 = scmp.eq.s32.totalorder %s12, 0
      %p48 = por %p46, %p47
      %p49 = scmp.ne.s32.totalorder %s41, %s43
      %p50 = scmp.eq.s32.totalorder %s17, 2
      %p51 = por %p49, %p50
      %p52 = scmp.ne.s32.totalorder %s43, %s44
      %p53 = scmp.eq.s32.totalorder %s17, 0
      %p54 = por %p52, %p53
      %p55 = scmp.ne.s32.totalorder %s43, %s44
      %p56 = scmp.eq.s32.totalorder %s18, 2
      %p57 = por %p55, %p56
      %p59 = scmp.ne.s32.totalorder %s44, %s58
      %p60 = scmp.eq.s32.totalorder %s18, 0
      %p61 = por %p59, %p60
      %s63 = sadd.s32 %s62, 1
      %p66 = scmp.eq.s32.totalorder %s12, 2
      %p67 = scmp.ne.s32.totalorder %s62, %s64
      %p68 = scmp.eq.s32.totalorder %s12, 0
      %p69 = por %p67, %p68
      %p70 = scmp.ne.s32.totalorder %s62, %s64
      %p71 = scmp.eq.s32.totalorder %s17, 2
      %p72 = por %p70, %p71
      %p73 = scmp.ne.s32.totalorder %s64, %s65
      %p74 = scmp.eq.s32.totalorder %s17, 0
      %p75 = por %p73, %p74
      %p76 = scmp.ne.s32.totalorder %s64, %s65
      %p77 = scmp.eq.s32.totalorder %s18, 2
      %p78 = por %p76, %p77
      %p80 = scmp.ne.s32.totalorder %s65, %s79
      %p81 = scmp.eq.s32.totalorder %s18, 0
      %p82 = por %p80, %p81
      %s84 = sadd.s32 %s83, 1
      %p87 = scmp.eq.s32.totalorder %s12, 2
      %p88 = scmp.ne.s32.totalorder %s83, %s85
      %p89 = scmp.eq.s32.totalorder %s12, 0
      %p90 = por %p88, %p89
      %p91 = scmp.ne.s32.totalorder %s83, %s85
      %p92 = scmp.eq.s32.totalorder %s17, 2
      %p93 = por %p91, %p92
      %p94 = scmp.ne.s32.totalorder %s85, %s86
      %p95 = scmp.eq.s32.totalorder %s17, 0
      %p96 = por %p94, %p95
      %p97 = scmp.ne.s32.totalorder %s85, %s86
      %p98 = scmp.eq.s32.totalorder %s18, 2
      %p99 = por %p97, %p98
      %p101 = scmp.ne.s32.totalorder %s86, %s100
      %p102 = scmp.eq.s32.totalorder %s18, 0
      %p103 = por %p101, %p102
      %s105 = sadd.s32 %s104, 1
      %p108 = scmp.eq.s32.totalorder %s12, 2
      %p109 = scmp.ne.s32.totalorder %s104, %s106
      %p110 = scmp.eq.s32.totalorder %s12, 0
      %p111 = por %p109, %p110
      %p112 = scmp.ne.s32.totalorder %s104, %s106
      %p113 = scmp.eq.s32.totalorder %s17, 2
      %p114 = por %p112, %p113
      %p115 = scmp.ne.s32.totalorder %s106, %s107
      %p116 = scmp.eq.s32.totalorder %s17, 0
      %p117 = por %p115, %p116
      %p118 = scmp.ne.s32.totalorder %s106, %s107
      %p119 = scmp.eq.s32.totalorder %s18, 2
      %p120 = por %p118, %p119
      %p122 = scmp.ne.s32.totalorder %s107, %s121
      %p123 = scmp.eq.s32.totalorder %s18, 0
      %p124 = por %p122, %p123
      %s125 = ssub.s32 %s12, %s19
      %p126 = scmp.eq.s32.totalorder %s125, 0
      %s128 = sadd.s32 %s127, 1
      %s129 = scalar_select %p126, %s127, %s128
      %p132 = pneg %p126
      %p133 = scmp.eq.s32.totalorder %s12, 2
      %p134 = por %p132, %p133
      %p135 = scmp.ne.s32.totalorder %s127, %s130
      %p136 = scmp.eq.s32.totalorder %s12, 0
      %p137 = por %p135, %p136
      %p138 = scmp.ne.s32.totalorder %s127, %s130
      %p139 = scmp.eq.s32.totalorder %s17, 2
      %p140 = por %p138, %p139
      %p141 = scmp.ne.s32.totalorder %s130, %s131
      %p142 = scmp.eq.s32.totalorder %s17, 0
      %p143 = por %p141, %p142
      %p144 = scmp.ne.s32.totalorder %s130, %s131
      %p145 = scmp.eq.s32.totalorder %s18, 2
      %p146 = por %p144, %p145
      %p148 = scmp.ne.s32.totalorder %s131, %s147
      %p149 = scmp.eq.s32.totalorder %s18, 0
      %p150 = por %p148, %p149
      %p151 = scmp.le.s32.totalorder 1, %s12
      %p152 = scmp.lt.s32.totalorder %s12, 4
      %p153 = pnand %p151, %p152
      %p154 = pneg %p153
      // Predicated region
      $region9: #{net_forward.4} parent=5 // pred_check
        _
      $region10: #{net_forward.4} parent=5 // pred_check_branch
        %156 = sbr.rel (%p153) target = $region12
      $region11: #{net_forward.4} parent=5 // pred_region
        %s157 = ssub.s32 %s12, 1
        // Predicated region
        $region13: #{net_forward.4} parent=11 // pred_check
          %p158 = pneg %p33
        $region14: #{net_forward.4} parent=11 // pred_check_branch
          %160 = sbr.rel (%p158) target = $region16
        $region15: #{net_forward.4} parent=11 // pred_region
          _
        $region16: #{net_forward.4} parent=11 // pred_fallthru
          _
        // Predicated region
        $region17: #{net_forward.4} parent=11 // pred_check
          %p161 = pneg %p54
        $region18: #{net_forward.4} parent=11 // pred_check_branch
          %163 = sbr.rel (%p161) target = $region20
        $region19: #{net_forward.4} parent=11 // pred_region
          _
        $region20: #{net_forward.4} parent=11 // pred_fallthru
          _
        // Predicated region
        $region21: #{net_forward.4} parent=11 // pred_check
          %p164 = pneg %p75
        $region22: #{net_forward.4} parent=11 // pred_check_branch
          %166 = sbr.rel (%p164) target = $region24
        $region23: #{net_forward.4} parent=11 // pred_region
          %s168 = ssub.s32 2048, 2048
          %169 = vsyncadd [#allocation7], %s168
          %s170 = sshll.u32 [#allocation6], 4
          %s171 = int_to_ptr.vmem [resolvable:$true] %s170
          %176 = dma.hbm_to_vmem [thread:$0]  %s2, 2048, %s171, [#allocation7], 64, 64, 4
        $region24: #{net_forward.4} parent=11 // pred_fallthru
          _
        // Predicated region
        $region25: #{net_forward.4} parent=11 // pred_check
          %p177 = pneg %p96
        $region26: #{net_forward.4} parent=11 // pred_check_branch
          %179 = sbr.rel (%p177) target = $region28
        $region27: #{net_forward.4} parent=11 // pred_region
          _
        $region28: #{net_forward.4} parent=11 // pred_fallthru
          _
        // Predicated region
        $region29: #{net_forward.4} parent=11 // pred_check
          %p180 = pneg %p117
        $region30: #{net_forward.4} parent=11 // pred_check_branch
          %182 = sbr.rel (%p180) target = $region32
        $region31: #{net_forward.4} parent=11 // pred_region
          _
        $region32: #{net_forward.4} parent=11 // pred_fallthru
          _
      $region12: #{net_forward.4} parent=5 // pred_fallthru
        _
      %p183 = scmp.lt.s32.totalorder %s12, 3
      // Predicated region
      $region33: #{net_forward.4} parent=5 // pred_check
        %p184 = pneg %p183
      $region34: #{net_forward.4} parent=5 // pred_check_branch
        %186 = sbr.rel (%p184) target = $region36
      $region35: #{net_forward.4} parent=5 // pred_region
        _
      $region36: #{net_forward.4} parent=5 // pred_fallthru
        _
      %p187 = scmp.le.s32.totalorder 1, %s12
      %p188 = scmp.lt.s32.totalorder %s12, 4
      %p189 = pnand %p187, %p188
      %p190 = pneg %p189
      // Predicated region
      $region37: #{net_forward.4} parent=5 // pred_check
        _
      $region38: #{net_forward.4} parent=5 // pred_check_branch
        %192 = sbr.rel (%p189) target = $region40
      $region39: #{net_forward.4} parent=5 // pred_region
        %s193 = ssub.s32 %s12, 1
        // Predicated region
        $region41: #{net_forward.4} parent=39 // pred_check
          %p194 = pneg %p75
        $region42: #{net_forward.4} parent=39 // pred_check_branch
          %196 = sbr.rel (%p194) target = $region44
        $region43: #{net_forward.4} parent=39 // pred_region
          %197 = dma.done [#allocation7], 2048
        $region44: #{net_forward.4} parent=39 // pred_fallthru
          _
        %p198 = pneg %p33
        %p199 = pneg %p30
        %p200 = pneg %p54
        %p201 = pneg %p51
        %p202 = pneg %p75
        %p203 = pneg %p72
        %p204 = pneg %p96
        %p205 = pneg %p93
        %p206 = pneg %p117
        %p207 = pneg %p114
        %p208 = pneg %p143
        %p209 = pneg %p140
        %p210 = scmp.lt.s32.totalorder %s17, 2
        %s211 = scalar_select %p210, %s17, 2
        %s212 = smul.addr %s211, 4
        %s213 = scalar_lea.vmem %s5, %s212
        %p214 = scmp.lt.s32.totalorder %s17, 2
        %s215 = scalar_select %p214, %s17, 2
        %s216 = smul.addr %s215, 4
        %s217 = scalar_lea.vmem %s5, %s216
        %p219 = scmp.eq.s32.totalorder %s17, 0
        // Predicated region
        $region45: #{net_forward.4} parent=39 // pred_check
          %p220 = pneg %p219
        $region46: #{net_forward.4} parent=39 // pred_check_branch
          %222 = sbr.rel (%p220) target = $region48
        $region47: #{net_forward.4} parent=39 // pred_region
          %223 = vst [vmem:[#allocation2] sm:$0xff] 0.0
          %224 = vst [vmem:[#allocation2 + $0x8] sm:$0xff] 0.0
          %225 = vst [vmem:[#allocation3] sm:$0xff] 0.0
          %226 = vst [vmem:[#allocation3 + $0x8] sm:$0xff] 0.0
          %227 = vst [vmem:[#allocation4] sm:$0xff] 0.0
          %228 = vst [vmem:[#allocation5] sm:$0xff] 0.0
        $region48: #{net_forward.4} parent=39 // pred_fallthru
          _
        %v229 = vld [vmem:[#allocation2] sm:$0xff]
        %v230 = vld [vmem:[#allocation2 + $0x8] sm:$0xff]
        %v231 = vld [vmem:[#allocation3] sm:$0xff]
        %v232 = vld [vmem:[#allocation3 + $0x8] sm:$0xff]
        %v233 = vpack.c.bf16 %v229, %v229
        %v234 = vpack.c.bf16 %v230, %v230
        %v235 = vld [vmem:[%s1] sm:$0xff]
        %v236 = vld [vmem:[%s1 + $0x8] sm:$0xff]
        %v237 = vld [vmem:[%s1 + $0x10] sm:$0xff]
        %v238 = vld [vmem:[%s1 + $0x18] sm:$0xff]
        %v239 = vld [vmem:[%s1 + $0x20] sm:$0xff]
        %v240 = vld [vmem:[%s1 + $0x28] sm:$0xff]
        %v241 = vld [vmem:[%s1 + $0x30] sm:$0xff]
        %v242 = vld [vmem:[%s1 + $0x38] sm:$0xff]
        %v243 = vld [vmem:[%s1 + $0x40] sm:$0xff]
        %v244 = vld [vmem:[%s1 + $0x48] sm:$0xff]
        %v245 = vld [vmem:[%s1 + $0x50] sm:$0xff]
        %v246 = vld [vmem:[%s1 + $0x58] sm:$0xff]
        %v247 = vld [vmem:[%s1 + $0x60] sm:$0xff]
        %v248 = vld [vmem:[%s1 + $0x68] sm:$0xff]
        %v249 = vld [vmem:[%s1 + $0x70] sm:$0xff]
        %v250 = vld [vmem:[%s1 + $0x78] sm:$0xff]
        %v251 = vld [vmem:[%s1 + $0x80] sm:$0xff]
        %v252 = vld [vmem:[%s1 + $0x88] sm:$0xff]
        %v253 = vld [vmem:[%s1 + $0x90] sm:$0xff]
        %v254 = vld [vmem:[%s1 + $0x98] sm:$0xff]
        %v255 = vld [vmem:[%s1 + $0xa0] sm:$0xff]
        %v256 = vld [vmem:[%s1 + $0xa8] sm:$0xff]
        %v257 = vld [vmem:[%s1 + $0xb0] sm:$0xff]
        %v258 = vld [vmem:[%s1 + $0xb8] sm:$0xff]
        %v259 = vld [vmem:[%s1 + $0xc0] sm:$0xff]
        %v260 = vld [vmem:[%s1 + $0xc8] sm:$0xff]
        %v261 = vld [vmem:[%s1 + $0xd0] sm:$0xff]
        %v262 = vld [vmem:[%s1 + $0xd8] sm:$0xff]
        %v263 = vld [vmem:[%s1 + $0xe0] sm:$0xff]
        %v264 = vld [vmem:[%s1 + $0xe8] sm:$0xff]
        %v265 = vld [vmem:[%s1 + $0xf0] sm:$0xff]
        %v266 = vld [vmem:[%s1 + $0xf8] sm:$0xff]
        %v299 = vunpack.c.l.b16 %v235
        %v300 = vunpack.c.h.b16 %v235
        %v301 = vunpack.c.l.b16 %v236
        %v302 = vunpack.c.h.b16 %v236
        %v303 = vunpack.c.l.b16 %v237
        %v304 = vunpack.c.h.b16 %v237
        %v305 = vunpack.c.l.b16 %v238
        %v306 = vunpack.c.h.b16 %v238
        %v307 = vunpack.c.l.b16 %v239
        %v308 = vunpack.c.h.b16 %v239
        %v309 = vunpack.c.l.b16 %v240
        %v310 = vunpack.c.h.b16 %v240
        %v311 = vunpack.c.l.b16 %v241
        %v312 = vunpack.c.h.b16 %v241
        %v313 = vunpack.c.l.b16 %v242
        %v314 = vunpack.c.h.b16 %v242
        %v315 = vunpack.c.l.b16 %v243
        %v316 = vunpack.c.h.b16 %v243
        %v317 = vunpack.c.l.b16 %v244
        %v318 = vunpack.c.h.b16 %v244
        %v319 = vunpack.c.l.b16 %v245
        %v320 = vunpack.c.h.b16 %v245
        %v321 = vunpack.c.l.b16 %v246
        %v322 = vunpack.c.h.b16 %v246
        %v323 = vunpack.c.l.b16 %v247
        %v324 = vunpack.c.h.b16 %v247
        %v325 = vunpack.c.l.b16 %v248
        %v326 = vunpack.c.h.b16 %v248
        %v327 = vunpack.c.l.b16 %v249
        %v328 = vunpack.c.h.b16 %v249
        %v329 = vunpack.c.l.b16 %v250
        %v330 = vunpack.c.h.b16 %v250
        %v331 = vunpack.c.l.b16 %v251
        %v332 = vunpack.c.h.b16 %v251
        %v333 = vunpack.c.l.b16 %v252
        %v334 = vunpack.c.h.b16 %v252
        %v335 = vunpack.c.l.b16 %v253
        %v336 = vunpack.c.h.b16 %v253
        %v337 = vunpack.c.l.b16 %v254
        %v338 = vunpack.c.h.b16 %v254
        %v339 = vunpack.c.l.b16 %v255
        %v340 = vunpack.c.h.b16 %v255
        %v341 = vunpack.c.l.b16 %v256
        %v342 = vunpack.c.h.b16 %v256
        %v343 = vunpack.c.l.b16 %v257
        %v344 = vunpack.c.h.b16 %v257
        %v345 = vunpack.c.l.b16 %v258
        %v346 = vunpack.c.h.b16 %v258
        %v347 = vunpack.c.l.b16 %v259
        %v348 = vunpack.c.h.b16 %v259
        %v349 = vunpack.c.l.b16 %v260
        %v350 = vunpack.c.h.b16 %v260
        %v351 = vunpack.c.l.b16 %v261
        %v352 = vunpack.c.h.b16 %v261
        %v353 = vunpack.c.l.b16 %v262
        %v354 = vunpack.c.h.b16 %v262
        %v355 = vunpack.c.l.b16 %v263
        %v356 = vunpack.c.h.b16 %v263
        %v357 = vunpack.c.l.b16 %v264
        %v358 = vunpack.c.h.b16 %v264
        %v359 = vunpack.c.l.b16 %v265
        %v360 = vunpack.c.h.b16 %v265
        %v361 = vunpack.c.l.b16 %v266
        %v362 = vunpack.c.h.b16 %v266
        %v363 = vpack.c.b16 %v301, %v299
        %v364 = vpack.c.b16 %v302, %v300
        %v365 = vpack.c.b16 %v305, %v303
        %v366 = vpack.c.b16 %v306, %v304
        %v367 = vpack.c.b16 %v309, %v307
        %v368 = vpack.c.b16 %v310, %v308
        %v369 = vpack.c.b16 %v313, %v311
        %v370 = vpack.c.b16 %v314, %v312
        %v371 = vpack.c.b16 %v317, %v315
        %v372 = vpack.c.b16 %v318, %v316
        %v373 = vpack.c.b16 %v321, %v319
        %v374 = vpack.c.b16 %v322, %v320
        %v375 = vpack.c.b16 %v325, %v323
        %v376 = vpack.c.b16 %v326, %v324
        %v377 = vpack.c.b16 %v329, %v327
        %v378 = vpack.c.b16 %v330, %v328
        %v379 = vpack.c.b16 %v333, %v331
        %v380 = vpack.c.b16 %v334, %v332
        %v381 = vpack.c.b16 %v337, %v335
        %v382 = vpack.c.b16 %v338, %v336
        %v383 = vpack.c.b16 %v341, %v339
        %v384 = vpack.c.b16 %v342, %v340
        %v385 = vpack.c.b16 %v345, %v343
        %v386 = vpack.c.b16 %v346, %v344
        %v387 = vpack.c.b16 %v349, %v347
        %v388 = vpack.c.b16 %v350, %v348
        %v389 = vpack.c.b16 %v353, %v351
        %v390 = vpack.c.b16 %v354, %v352
        %v391 = vpack.c.b16 %v357, %v355
        %v392 = vpack.c.b16 %v358, %v356
        %v393 = vpack.c.b16 %v361, %v359
        %v394 = vpack.c.b16 %v362, %v360
        %427 = vmatprep.subr.bf16.mxu0 %v364
        %428 = vmatpush1.bf16.msra.mxu0 %v363
        %429 = vmatprep.subr.bf16.mxu0 %v366
        %430 = vmatpush1.bf16.msra.mxu0 %v365
        %431 = vmatprep.subr.bf16.mxu0 %v368
        %432 = vmatpush1.bf16.msra.mxu0 %v367
        %433 = vmatprep.subr.bf16.mxu0 %v370
        %434 = vmatpush1.bf16.msra.mxu0 %v369
        %435 = vmatprep.subr.bf16.mxu0 %v372
        %436 = vmatpush1.bf16.msra.mxu0 %v371
        %437 = vmatprep.subr.bf16.mxu0 %v374
        %438 = vmatpush1.bf16.msra.mxu0 %v373
        %439 = vmatprep.subr.bf16.mxu0 %v376
        %440 = vmatpush1.bf16.msra.mxu0 %v375
        %441 = vmatprep.subr.bf16.mxu0 %v378
        %442 = vmatpush1.bf16.msra.mxu0 %v377
        %443 = vmatprep.subr.bf16.mxu0 %v380
        %444 = vmatpush1.bf16.msra.mxu0 %v379
        %445 = vmatprep.subr.bf16.mxu0 %v382
        %446 = vmatpush1.bf16.msra.mxu0 %v381
        %447 = vmatprep.subr.bf16.mxu0 %v384
        %448 = vmatpush1.bf16.msra.mxu0 %v383
        %449 = vmatprep.subr.bf16.mxu0 %v386
        %450 = vmatpush1.bf16.msra.mxu0 %v385
        %451 = vmatprep.subr.bf16.mxu0 %v388
        %452 = vmatpush1.bf16.msra.mxu0 %v387
        %453 = vmatprep.subr.bf16.mxu0 %v390
        %454 = vmatpush1.bf16.msra.mxu0 %v389
        %455 = vmatprep.subr.bf16.mxu0 %v392
        %456 = vmatpush1.bf16.msra.mxu0 %v391
        %457 = vmatprep.subr.bf16.mxu0 %v394
        %458 = vmatpush1.bf16.msra.mxu0 %v393
        %459 = vmatprep.mubr.bf16.mxu0 %v234
        %460 = vmatmul.mubr.bf16.gmra.mrb[0].mxu0 %v233
        %v461 = vpop.f32.mrb[0].mxu0
        %v462 = vadd.f32 0.0, %v461
        %v463 = vpop.f32.mrb[0].mxu0
        %v464 = vadd.f32 0.0, %v463
        %v465 = vpop.f32.mrb[0].mxu0
        %v466 = vpop.f32.mrb[0].mxu0
        %467 = vdwg.mxu0
        %v468 = vmul.f32 %v231, 0.9
        %v469 = vmul.f32 %v232, 0.9
        %v470 = vld [vmem:[%s0] sm:$0xff]
        %v471 = vld [vmem:[%s0 + $0x8] sm:$0xff]
        %v472 = vadd.f32 %v468, %v470
        %v473 = vadd.f32 %v469, %v471
        %v474 = vadd.f32 %v472, %v462
        %v475 = vadd.f32 %v473, %v464
        %v476 = vsub.f32 %v474, %v229
        %v477 = vsub.f32 %v475, %v230
        %vm478 = vcmp.gt.f32.partialorder %v476, 1.0
        %vm479 = vcmp.gt.f32.partialorder %v477, 1.0
        %v480 = vsel %vm478, 1, 0
        %v481 = vsel %vm479, 1, 0
        %v482 = vcvt.s32.f32 %v480
        %v483 = vcvt.s32.f32 %v481
        %484 = vst [vmem:[#allocation2] sm:$0xff] %v482
        %485 = vst [vmem:[#allocation2 + $0x8] sm:$0xff] %v483
        %486 = vst [vmem:[#allocation3] sm:$0xff] %v476
        %487 = vst [vmem:[#allocation3 + $0x8] sm:$0xff] %v477
        %v488 = vld [vmem:[#allocation4] sm:$0xff]
        %v489 = vld [vmem:[#allocation5] sm:$0xff]
        %v490 = vpack.c.bf16 %v482, %v482
        %v491 = vpack.c.bf16 %v483, %v483
        %v492 = vld [vmem:[#allocation6] sm:$0xf]
        %v493 = vld [vmem:[#allocation6 + $0x4] sm:$0xf]
        %v494 = vld [vmem:[#allocation6 + $0x8] sm:$0xf]
        %v495 = vld [vmem:[#allocation6 + $0xc] sm:$0xf]
        %v496 = vld [vmem:[#allocation6 + $0x10] sm:$0xf]
        %v497 = vld [vmem:[#allocation6 + $0x14] sm:$0xf]
        %v498 = vld [vmem:[#allocation6 + $0x18] sm:$0xf]
        %v499 = vld [vmem:[#allocation6 + $0x1c] sm:$0xf]
        %v500 = vld [vmem:[#allocation6 + $0x20] sm:$0xf]
        %v501 = vld [vmem:[#allocation6 + $0x24] sm:$0xf]
        %v502 = vld [vmem:[#allocation6 + $0x28] sm:$0xf]
        %v503 = vld [vmem:[#allocation6 + $0x2c] sm:$0xf]
        %v504 = vld [vmem:[#allocation6 + $0x30] sm:$0xf]
        %v505 = vld [vmem:[#allocation6 + $0x34] sm:$0xf]
        %v506 = vld [vmem:[#allocation6 + $0x38] sm:$0xf]
        %v507 = vld [vmem:[#allocation6 + $0x3c] sm:$0xf]
        %v508 = vld [vmem:[#allocation6 + $0x40] sm:$0xf]
        %v509 = vld [vmem:[#allocation6 + $0x44] sm:$0xf]
        %v510 = vld [vmem:[#allocation6 + $0x48] sm:$0xf]
        %v511 = vld [vmem:[#allocation6 + $0x4c] sm:$0xf]
        %v512 = vld [vmem:[#allocation6 + $0x50] sm:$0xf]
        %v513 = vld [vmem:[#allocation6 + $0x54] sm:$0xf]
        %v514 = vld [vmem:[#allocation6 + $0x58] sm:$0xf]
        %v515 = vld [vmem:[#allocation6 + $0x5c] sm:$0xf]
        %v516 = vld [vmem:[#allocation6 + $0x60] sm:$0xf]
        %v517 = vld [vmem:[#allocation6 + $0x64] sm:$0xf]
        %v518 = vld [vmem:[#allocation6 + $0x68] sm:$0xf]
        %v519 = vld [vmem:[#allocation6 + $0x6c] sm:$0xf]
        %v520 = vld [vmem:[#allocation6 + $0x70] sm:$0xf]
        %v521 = vld [vmem:[#allocation6 + $0x74] sm:$0xf]
        %v522 = vld [vmem:[#allocation6 + $0x78] sm:$0xf]
        %v523 = vld [vmem:[#allocation6 + $0x7c] sm:$0xf]
        %v524 = vld [vmem:[%s3] sm:$0x1]
        %v526 = vlaneseq
        %v527 = vshrl.u32 %v526, 7
        %v528 = vsub.s32 0, %v527
        %v529 = vrot.slane %v524, %v528
        %v563 = vunpack.c.l.b16 %v492
        %v564 = vunpack.c.l.b16 %v493
        %v565 = vunpack.c.l.b16 %v494
        %v566 = vunpack.c.l.b16 %v495
        %v567 = vunpack.c.l.b16 %v496
        %v568 = vunpack.c.l.b16 %v497
        %v569 = vunpack.c.l.b16 %v498
        %v570 = vunpack.c.l.b16 %v499
        %v571 = vunpack.c.l.b16 %v500
        %v572 = vunpack.c.l.b16 %v501
        %v573 = vunpack.c.l.b16 %v502
        %v574 = vunpack.c.l.b16 %v503
        %v575 = vunpack.c.l.b16 %v504
        %v576 = vunpack.c.l.b16 %v505
        %v577 = vunpack.c.l.b16 %v506
        %v578 = vunpack.c.l.b16 %v507
        %v579 = vunpack.c.l.b16 %v508
        %v580 = vunpack.c.l.b16 %v509
        %v581 = vunpack.c.l.b16 %v510
        %v582 = vunpack.c.l.b16 %v511
        %v583 = vunpack.c.l.b16 %v512
        %v584 = vunpack.c.l.b16 %v513
        %v585 = vunpack.c.l.b16 %v514
        %v586 = vunpack.c.l.b16 %v515
        %v587 = vunpack.c.l.b16 %v516
        %v588 = vunpack.c.l.b16 %v517
        %v589 = vunpack.c.l.b16 %v518
        %v590 = vunpack.c.l.b16 %v519
        %v591 = vunpack.c.l.b16 %v520
        %v592 = vunpack.c.l.b16 %v521
        %v593 = vunpack.c.l.b16 %v522
        %v594 = vunpack.c.l.b16 %v523
        %v595 = vpack.c.b16 %v564, %v563
        %v596 = vpack.c.b16 %v566, %v565
        %v597 = vpack.c.b16 %v568, %v567
        %v598 = vpack.c.b16 %v570, %v569
        %v599 = vpack.c.b16 %v572, %v571
        %v600 = vpack.c.b16 %v574, %v573
        %v601 = vpack.c.b16 %v576, %v575
        %v602 = vpack.c.b16 %v578, %v577
        %v603 = vpack.c.b16 %v580, %v579
        %v604 = vpack.c.b16 %v582, %v581
        %v605 = vpack.c.b16 %v584, %v583
        %v606 = vpack.c.b16 %v586, %v585
        %v607 = vpack.c.b16 %v588, %v587
        %v608 = vpack.c.b16 %v590, %v589
        %v609 = vpack.c.b16 %v592, %v591
        %v610 = vpack.c.b16 %v594, %v593
        %627 = vmatprep.subr.bf16.mxu0 0
        %628 = vmatpush1.bf16.msra.mxu0 %v595
        %629 = vmatprep.subr.bf16.mxu0 0
        %630 = vmatpush1.bf16.msra.mxu0 %v596
        %631 = vmatprep.subr.bf16.mxu0 0
        %632 = vmatpush1.bf16.msra.mxu0 %v597
        %633 = vmatprep.subr.bf16.mxu0 0
        %634 = vmatpush1.bf16.msra.mxu0 %v598
        %635 = vmatprep.subr.bf16.mxu0 0
        %636 = vmatpush1.bf16.msra.mxu0 %v599
        %637 = vmatprep.subr.bf16.mxu0 0
        %638 = vmatpush1.bf16.msra.mxu0 %v600
        %639 = vmatprep.subr.bf16.mxu0 0
        %640 = vmatpush1.bf16.msra.mxu0 %v601
        %641 = vmatprep.subr.bf16.mxu0 0
        %642 = vmatpush1.bf16.msra.mxu0 %v602
        %643 = vmatprep.subr.bf16.mxu0 0
        %644 = vmatpush1.bf16.msra.mxu0 %v603
        %645 = vmatprep.subr.bf16.mxu0 0
        %646 = vmatpush1.bf16.msra.mxu0 %v604
        %647 = vmatprep.subr.bf16.mxu0 0
        %648 = vmatpush1.bf16.msra.mxu0 %v605
        %649 = vmatprep.subr.bf16.mxu0 0
        %650 = vmatpush1.bf16.msra.mxu0 %v606
        %651 = vmatprep.subr.bf16.mxu0 0
        %652 = vmatpush1.bf16.msra.mxu0 %v607
        %653 = vmatprep.subr.bf16.mxu0 0
        %654 = vmatpush1.bf16.msra.mxu0 %v608
        %655 = vmatprep.subr.bf16.mxu0 0
        %656 = vmatpush1.bf16.msra.mxu0 %v609
        %657 = vmatprep.subr.bf16.mxu0 0
        %658 = vmatpush1.bf16.msra.mxu0 %v610
        %659 = vmatprep.mubr.bf16.mxu0 %v491
        %660 = vmatmul.mubr.bf16.gmra.mrb[0].mxu0 %v490
        %v661 = vpop.f32.mrb[0].mxu0
        %v662 = vadd.f32 %v529, %v661
        %v663 = vpop.f32.mrb[0].mxu0
        %v664 = vpop.f32.mrb[0].mxu0
        %v665 = vpop.f32.mrb[0].mxu0
        %666 = vdwg.mxu0
        %v667 = vpack.c.bf16 %v488, %v488
        %v668 = vld [vmem:[%s4] sm:$0xf]
        %v669 = vld [vmem:[%s4 + $0x4] sm:$0xf]
        %v670 = vld [vmem:[%s4 + $0x8] sm:$0xf]
        %v671 = vld [vmem:[%s4 + $0xc] sm:$0xf]
        %v672 = vld [vmem:[%s4 + $0x10] sm:$0xf]
        %v673 = vld [vmem:[%s4 + $0x14] sm:$0xf]
        %v674 = vld [vmem:[%s4 + $0x18] sm:$0xf]
        %v675 = vld [vmem:[%s4 + $0x1c] sm:$0xf]
        %v676 = vld [vmem:[%s4 + $0x20] sm:$0xf]
        %v677 = vld [vmem:[%s4 + $0x24] sm:$0xf]
        %v678 = vld [vmem:[%s4 + $0x28] sm:$0xf]
        %v679 = vld [vmem:[%s4 + $0x2c] sm:$0xf]
        %v680 = vld [vmem:[%s4 + $0x30] sm:$0xf]
        %v681 = vld [vmem:[%s4 + $0x34] sm:$0xf]
        %v682 = vld [vmem:[%s4 + $0x38] sm:$0xf]
        %v683 = vld [vmem:[%s4 + $0x3c] sm:$0xf]
        %v700 = vunpack.c.l.b16 %v668
        %v701 = vunpack.c.l.b16 %v669
        %v702 = vunpack.c.l.b16 %v670
        %v703 = vunpack.c.l.b16 %v671
        %v704 = vunpack.c.l.b16 %v672
        %v705 = vunpack.c.l.b16 %v673
        %v706 = vunpack.c.l.b16 %v674
        %v707 = vunpack.c.l.b16 %v675
        %v708 = vunpack.c.l.b16 %v676
        %v709 = vunpack.c.l.b16 %v677
        %v710 = vunpack.c.l.b16 %v678
        %v711 = vunpack.c.l.b16 %v679
        %v712 = vunpack.c.l.b16 %v680
        %v713 = vunpack.c.l.b16 %v681
        %v714 = vunpack.c.l.b16 %v682
        %v715 = vunpack.c.l.b16 %v683
        %v716 = vpack.c.b16 %v701, %v700
        %v717 = vpack.c.b16 %v703, %v702
        %v718 = vpack.c.b16 %v705, %v704
        %v719 = vpack.c.b16 %v707, %v706
        %v720 = vpack.c.b16 %v709, %v708
        %v721 = vpack.c.b16 %v711, %v710
        %v722 = vpack.c.b16 %v713, %v712
        %v723 = vpack.c.b16 %v715, %v714
        %732 = vmatprep.subr.bf16.mxu0 0
        %733 = vmatpush1.bf16.msra.mxu0 %v716
        %734 = vmatprep.subr.bf16.mxu0 0
        %735 = vmatpush1.bf16.msra.mxu0 %v717
        %736 = vmatprep.subr.bf16.mxu0 0
        %737 = vmatpush1.bf16.msra.mxu0 %v718
        %738 = vmatprep.subr.bf16.mxu0 0
        %739 = vmatpush1.bf16.msra.mxu0 %v719
        %740 = vmatprep.subr.bf16.mxu0 0
        %741 = vmatpush1.bf16.msra.mxu0 %v720
        %742 = vmatprep.subr.bf16.mxu0 0
        %743 = vmatpush1.bf16.msra.mxu0 %v721
        %744 = vmatprep.subr.bf16.mxu0 0
        %745 = vmatpush1.bf16.msra.mxu0 %v722
        %746 = vmatprep.subr.bf16.mxu0 0
        %747 = vmatpush1.bf16.msra.mxu0 %v723
        %748 = vmatprep.subr.bf16.mxu0 0
        %749 = vmatpush1.bf16.msra.mxu0 0
        %750 = vmatprep.subr.bf16.mxu0 0
        %751 = vmatpush1.bf16.msra.mxu0 0
        %752 = vmatprep.subr.bf16.mxu0 0
        %753 = vmatpush1.bf16.msra.mxu0 0
        %754 = vmatprep.subr.bf16.mxu0 0
        %755 = vmatpush1.bf16.msra.mxu0 0
        %756 = vmatprep.subr.bf16.mxu0 0
        %757 = vmatpush1.bf16.msra.mxu0 0
        %758 = vmatprep.subr.bf16.mxu0 0
        %759 = vmatpush1.bf16.msra.mxu0 0
        %760 = vmatprep.subr.bf16.mxu0 0
        %761 = vmatpush1.bf16.msra.mxu0 0
        %762 = vmatprep.subr.bf16.mxu0 0
        %763 = vmatpush1.bf16.msra.mxu0 0
        %764 = vmatprep.mubr.bf16.mxu0 0
        %765 = vmatmul.mubr.bf16.gmra.mrb[0].mxu0 %v667
        %v766 = vpop.f32.mrb[0].mxu0
        %v767 = vadd.f32 0.0, %v766
        %v768 = vpop.f32.mrb[0].mxu0
        %v769 = vpop.f32.mrb[0].mxu0
        %v770 = vpop.f32.mrb[0].mxu0
        %771 = vdwg.mxu0
        %v772 = vmul.f32 %v489, 0.9
        %v773 = vadd.f32 %v772, %v662
        %v774 = vadd.f32 %v773, %v767
        %v775 = vsub.f32 %v774, %v488
        %vm776 = vcmp.gt.f32.partialorder %v775, 1.0
        %v777 = vsel %vm776, 1, 0
        %v778 = vcvt.s32.f32 %v777
        %779 = vst [vmem:[#allocation4] sm:$0xff] %v778
        %780 = vst [vmem:[#allocation5] sm:$0xff] %v775
        %v781 = vpack.c.bf16 %v778, %v778
        %782 = vst [vmem:[%s217] sm:$0xf] %v781
        %p783 = scmp.lt.s32.totalorder %s17, 2
        %s784 = scalar_select %p783, %s17, 2
        %s785 = smul.addr %s784, 4
        %s786 = scalar_lea.vmem %s5, %s785
        // Predicated region
        $region49: #{net_forward.4} parent=39 // pred_check
          %p787 = pneg %p140
        $region50: #{net_forward.4} parent=39 // pred_check_branch
          %789 = sbr.rel (%p787) target = $region52
        $region51: #{net_forward.4} parent=39 // pred_region
          _
        $region52: #{net_forward.4} parent=39 // pred_fallthru
          _
      $region40: #{net_forward.4} parent=5 // pred_fallthru
        _
      %p790 = scmp.le.s32.totalorder 2, %s12
      // Predicated region
      $region53: #{net_forward.4} parent=5 // pred_check
        %p791 = pneg %p790
      $region54: #{net_forward.4} parent=5 // pred_check_branch
        %793 = sbr.rel (%p791) target = $region56
      $region55: #{net_forward.4} parent=5 // pred_region
        %s794 = ssub.s32 %s12, 2
        // Predicated region
        $region57: #{net_forward.4} parent=55 // pred_check
          %p795 = pneg %p146
        $region58: #{net_forward.4} parent=55 // pred_check_branch
          %797 = sbr.rel (%p795) target = $region60
        $region59: #{net_forward.4} parent=55 // pred_region
          %p798 = scmp.lt.s32.totalorder %s18, 2
          %s799 = scalar_select %p798, %s18, 2
          %s800 = smul.addr %s799, 4
          %s801 = scalar_lea.vmem %s5, %s800
        $region60: #{net_forward.4} parent=55 // pred_fallthru
          _
      $region56: #{net_forward.4} parent=5 // pred_fallthru
        _
    $region6: #{net_forward.4} parent=1 // loop_footer
      %s16 = sadd.s32 1, %s12
    $region7: #{net_forward.4} parent=1 // loop_footer_branch
      %11 = sbr.rel target = $region3
    $region8: #{net_forward.4} parent=1 // loop_exit
      _
    %802 = vsyncpa [#allocation7], 1
    %s803 = scalar_lea.sflag [#allocation7], 1
    %804 = vsyncpa %s803, 1

// kernel: net_forward.5
$region0: #{net_forward.5}
  #allocation0 [shape = 'u32[]', space=smem, size = 0x4, offset = 0x4, fixed_abs, tag = 'smem constant byte address 0x4 - core index']
  #allocation1 [shape = 'u32[144,128]{1,0:T(1,128)}', space=vmem, size = 0x12000, scoped, tag = 'internal scratch']
  %s0 = inlined_call_operand.vmem [shape: bf16[8,512], index: 0, kind: input, shape index: {}]
  %s1 = inlined_call_operand.vmem [shape: bf16[512,256], index: 1, kind: input, shape index: {}]
  %s2 = inlined_call_operand.hbm [shape: f32[1,256], index: 2, kind: input, shape index: {}]
  %s3 = inlined_call_operand.vmem [shape: bf16[256,128], index: 3, kind: input, shape index: {}]
  %s4 = inlined_call_operand.vmem [shape: f32[1,128], index: 4, kind: input, shape index: {}]
  %s5 = inlined_call_operand.vmem [shape: bf16[128,128], index: 5, kind: input, shape index: {}]
  %s6 = inlined_call_operand.hbm [shape: f32[1,128], index: 6, kind: input, shape index: {}]
  %s7 = inlined_call_operand.vmem [shape: bf16[128,32], index: 7, kind: input, shape index: {}]
  %s8 = inlined_call_operand.hbm [shape: f32[1,32], index: 8, kind: input, shape index: {}]
  %s9 = inlined_call_operand.vmem [shape: bf16[32,16], index: 9, kind: input, shape index: {}]
  %s10 = inlined_call_operand.hbm [shape: f32[1,16], index: 10, kind: input, shape index: {}]
  %s11 = inlined_call_operand.vmem [shape: bf16[16,2], index: 11, kind: input, shape index: {}]
  %s12 = inlined_call_operand.hbm [shape: f32[1,2], index: 12, kind: input, shape index: {}]
  %s13 = inlined_call_operand.vmem [shape: f32[8,2], index: 13, kind: output, shape index: {}]
  %s14 = sld [smem:[#allocation0]]
  $region82: #{net_forward.5} parent=0
    _
  %s16 = ssub.s32 1, %s14
  %s17 = scalar_select 0, %s16, %s14
  $region1: #{net_forward.5} parent=0
    #allocation2 [shape = 'u8[1024]{0}', space=vmem, size = 0x400, scoped, tag = 'input window, operand 2, single buffered']
    #allocation3 [shape = 's32[1]{0}', space=sflag, size = 0x4, scoped, tag = 'scoped memory for net_forward.5']
    #allocation4 [shape = 'u8[512]{0}', space=vmem, size = 0x400, scoped, tag = 'input window, operand 6, single buffered']
    #allocation5 [shape = 's32[1]{0}', space=sflag, size = 0x4, scoped, tag = 'scoped memory for net_forward.5']
    #allocation6 [shape = 'u8[512]{0}', space=vmem, size = 0x400, scoped, tag = 'input window, operand 8, single buffered']
    #allocation7 [shape = 'u8[512]{0}', space=vmem, size = 0x400, scoped, tag = 'input window, operand 10, single buffered']
    #allocation8 [shape = 's32[1]{0}', space=sflag, size = 0x4, scoped, tag = 'scoped memory for net_forward.5']
    #allocation9 [shape = 'u8[512]{0}', space=vmem, size = 0x400, scoped, tag = 'input window, operand 12, single buffered']
    %18 = vsyncpa [#allocation3], 0
    %19 = vsyncpa [#allocation5], 0
    %20 = vsyncpa [#allocation8], 0
    // Predicated region
    $region2: #{net_forward.5} parent=1 // pred_check
      _
    $region3: #{net_forward.5} parent=1 // pred_check_branch
      %22 = sbr.rel (0) target = $region5
    $region4: #{net_forward.5} parent=1 // pred_region
      _
    $region5: #{net_forward.5} parent=1 // pred_fallthru
      _
    // Predicated region
    $region6: #{net_forward.5} parent=1 // pred_check
      _
    $region7: #{net_forward.5} parent=1 // pred_check_branch
      %24 = sbr.rel (0) target = $region9
    $region8: #{net_forward.5} parent=1 // pred_region
      _
    $region9: #{net_forward.5} parent=1 // pred_fallthru
      _
    // Predicated region
    $region10: #{net_forward.5} parent=1 // pred_check
      _
    $region11: #{net_forward.5} parent=1 // pred_check_branch
      %26 = sbr.rel (0) target = $region13
    $region12: #{net_forward.5} parent=1 // pred_region
      %s28 = ssub.s32 32, 32
      %29 = vsyncadd [#allocation3], %s28
      %s31 = sshll.u32 [#allocation2], 4
      %s32 = int_to_ptr.vmem [resolvable:$true] %s31
      %34 = dma.hbm_to_vmem [thread:$0]  %s2, 32, %s32, [#allocation3]
    $region13: #{net_forward.5} parent=1 // pred_fallthru
      _
    // Predicated region
    $region14: #{net_forward.5} parent=1 // pred_check
      _
    $region15: #{net_forward.5} parent=1 // pred_check_branch
      %36 = sbr.rel (0) target = $region17
    $region16: #{net_forward.5} parent=1 // pred_region
      _
    $region17: #{net_forward.5} parent=1 // pred_fallthru
      _
    // Predicated region
    $region18: #{net_forward.5} parent=1 // pred_check
      _
    $region19: #{net_forward.5} parent=1 // pred_check_branch
      %38 = sbr.rel (0) target = $region21
    $region20: #{net_forward.5} parent=1 // pred_region
      _
    $region21: #{net_forward.5} parent=1 // pred_fallthru
      _
    // Predicated region
    $region22: #{net_forward.5} parent=1 // pred_check
      _
    $region23: #{net_forward.5} parent=1 // pred_check_branch
      %40 = sbr.rel (0) target = $region25
    $region24: #{net_forward.5} parent=1 // pred_region
      _
    $region25: #{net_forward.5} parent=1 // pred_fallthru
      _
    // Predicated region
    $region26: #{net_forward.5} parent=1 // pred_check
      _
    $region27: #{net_forward.5} parent=1 // pred_check_branch
      %42 = sbr.rel (0) target = $region29
    $region28: #{net_forward.5} parent=1 // pred_region
      %s44 = ssub.s32 16, 16
      %45 = vsyncadd [#allocation5], %s44
      %s47 = sshll.u32 [#allocation4], 4
      %s48 = int_to_ptr.vmem [resolvable:$true] %s47
      %50 = dma.hbm_to_vmem [thread:$0]  %s6, 16, %s48, [#allocation5]
    $region29: #{net_forward.5} parent=1 // pred_fallthru
      _
    // Predicated region
    $region30: #{net_forward.5} parent=1 // pred_check
      _
    $region31: #{net_forward.5} parent=1 // pred_check_branch
      %52 = sbr.rel (0) target = $region33
    $region32: #{net_forward.5} parent=1 // pred_region
      _
    $region33: #{net_forward.5} parent=1 // pred_fallthru
      _
    // Predicated region
    $region34: #{net_forward.5} parent=1 // pred_check
      _
    $region35: #{net_forward.5} parent=1 // pred_check_branch
      %54 = sbr.rel (0) target = $region37
    $region36: #{net_forward.5} parent=1 // pred_region
      %s56 = ssub.s32 16, 16
      %57 = vsyncadd [#allocation5], %s56
      %s59 = sshll.u32 [#allocation6], 4
      %s60 = int_to_ptr.vmem [resolvable:$true] %s59
      %62 = dma.hbm_to_vmem [thread:$0]  %s8, 16, %s60, [#allocation5]
    $region37: #{net_forward.5} parent=1 // pred_fallthru
      _
    // Predicated region
    $region38: #{net_forward.5} parent=1 // pred_check
      _
    $region39: #{net_forward.5} parent=1 // pred_check_branch
      %64 = sbr.rel (0) target = $region41
    $region40: #{net_forward.5} parent=1 // pred_region
      _
    $region41: #{net_forward.5} parent=1 // pred_fallthru
      _
    // Predicated region
    $region42: #{net_forward.5} parent=1 // pred_check
      _
    $region43: #{net_forward.5} parent=1 // pred_check_branch
      %66 = sbr.rel (0) target = $region45
    $region44: #{net_forward.5} parent=1 // pred_region
      %s68 = ssub.s32 16, 16
      %69 = vsyncadd [#allocation8], %s68
      %s71 = sshll.u32 [#allocation7], 4
      %s72 = int_to_ptr.vmem [resolvable:$true] %s71
      %74 = dma.hbm_to_vmem [thread:$0]  %s10, 16, %s72, [#allocation8]
    $region45: #{net_forward.5} parent=1 // pred_fallthru
      _
    // Predicated region
    $region46: #{net_forward.5} parent=1 // pred_check
      _
    $region47: #{net_forward.5} parent=1 // pred_check_branch
      %76 = sbr.rel (0) target = $region49
    $region48: #{net_forward.5} parent=1 // pred_region
      _
    $region49: #{net_forward.5} parent=1 // pred_fallthru
      _
    // Predicated region
    $region50: #{net_forward.5} parent=1 // pred_check
      _
    $region51: #{net_forward.5} parent=1 // pred_check_branch
      %78 = sbr.rel (0) target = $region53
    $region52: #{net_forward.5} parent=1 // pred_region
      %s80 = ssub.s32 16, 16
      %81 = vsyncadd [#allocation8], %s80
      %s83 = sshll.u32 [#allocation9], 4
      %s84 = int_to_ptr.vmem [resolvable:$true] %s83
      %86 = dma.hbm_to_vmem [thread:$0]  %s12, 16, %s84, [#allocation8]
    $region53: #{net_forward.5} parent=1 // pred_fallthru
      _
    // Predicated region
    $region54: #{net_forward.5} parent=1 // pred_check
      _
    $region55: #{net_forward.5} parent=1 // pred_check_branch
      %88 = sbr.rel (0) target = $region57
    $region56: #{net_forward.5} parent=1 // pred_region
      %89 = dma.done [#allocation3], 32
    $region57: #{net_forward.5} parent=1 // pred_fallthru
      _
    // Predicated region
    $region58: #{net_forward.5} parent=1 // pred_check
      _
    $region59: #{net_forward.5} parent=1 // pred_check_branch
      %91 = sbr.rel (0) target = $region61
    $region60: #{net_forward.5} parent=1 // pred_region
      %92 = dma.done [#allocation5], 16
    $region61: #{net_forward.5} parent=1 // pred_fallthru
      _
    // Predicated region
    $region62: #{net_forward.5} parent=1 // pred_check
      _
    $region63: #{net_forward.5} parent=1 // pred_check_branch
      %94 = sbr.rel (0) target = $region65
    $region64: #{net_forward.5} parent=1 // pred_region
      %95 = dma.done [#allocation5], 16
    $region65: #{net_forward.5} parent=1 // pred_fallthru
      _
    // Predicated region
    $region66: #{net_forward.5} parent=1 // pred_check
      _
    $region67: #{net_forward.5} parent=1 // pred_check_branch
      %97 = sbr.rel (0) target = $region69
    $region68: #{net_forward.5} parent=1 // pred_region
      %98 = dma.done [#allocation8], 16
    $region69: #{net_forward.5} parent=1 // pred_fallthru
      _
    // Predicated region
    $region70: #{net_forward.5} parent=1 // pred_check
      _
    $region71: #{net_forward.5} parent=1 // pred_check_branch
      %100 = sbr.rel (0) target = $region73
    $region72: #{net_forward.5} parent=1 // pred_region
      %101 = dma.done [#allocation8], 16
    $region73: #{net_forward.5} parent=1 // pred_fallthru
      _
    %v103 = vld [vmem:[%s0] sm:$0xff]
    %v104 = vld [vmem:[%s0 + $0x8] sm:$0xff]
    %v105 = vld [vmem:[%s1] sm:$0xff]
    %v106 = vld [vmem:[%s1 + $0x8] sm:$0xff]
    %v107 = vld [vmem:[%s1 + $0x10] sm:$0xff]
    %v108 = vld [vmem:[%s1 + $0x18] sm:$0xff]
    %v109 = vld [vmem:[%s1 + $0x20] sm:$0xff]
    %v110 = vld [vmem:[%s1 + $0x28] sm:$0xff]
    %v111 = vld [vmem:[%s1 + $0x30] sm:$0xff]
    %v112 = vld [vmem:[%s1 + $0x38] sm:$0xff]
    %v113 = vld [vmem:[%s1 + $0x40] sm:$0xff]
    %v114 = vld [vmem:[%s1 + $0x48] sm:$0xff]
    %v115 = vld [vmem:[%s1 + $0x50] sm:$0xff]
    %v116 = vld [vmem:[%s1 + $0x58] sm:$0xff]
    %v117 = vld [vmem:[%s1 + $0x60] sm:$0xff]
    %v118 = vld [vmem:[%s1 + $0x68] sm:$0xff]
    %v119 = vld [vmem:[%s1 + $0x70] sm:$0xff]
    %v120 = vld [vmem:[%s1 + $0x78] sm:$0xff]
    %v121 = vld [vmem:[%s1 + $0x80] sm:$0xff]
    %v122 = vld [vmem:[%s1 + $0x88] sm:$0xff]
    %v123 = vld [vmem:[%s1 + $0x90] sm:$0xff]
    %v124 = vld [vmem:[%s1 + $0x98] sm:$0xff]
    %v125 = vld [vmem:[%s1 + $0xa0] sm:$0xff]
    %v126 = vld [vmem:[%s1 + $0xa8] sm:$0xff]
    %v127 = vld [vmem:[%s1 + $0xb0] sm:$0xff]
    %v128 = vld [vmem:[%s1 + $0xb8] sm:$0xff]
    %v129 = vld [vmem:[%s1 + $0xc0] sm:$0xff]
    %v130 = vld [vmem:[%s1 + $0xc8] sm:$0xff]
    %v131 = vld [vmem:[%s1 + $0xd0] sm:$0xff]
    %v132 = vld [vmem:[%s1 + $0xd8] sm:$0xff]
    %v133 = vld [vmem:[%s1 + $0xe0] sm:$0xff]
    %v134 = vld [vmem:[%s1 + $0xe8] sm:$0xff]
    %v135 = vld [vmem:[%s1 + $0xf0] sm:$0xff]
    %v136 = vld [vmem:[%s1 + $0xf8] sm:$0xff]
    %v137 = vld [vmem:[%s1 + $0x100] sm:$0xff]
    %v138 = vld [vmem:[%s1 + $0x108] sm:$0xff]
    %v139 = vld [vmem:[%s1 + $0x110] sm:$0xff]
    %v140 = vld [vmem:[%s1 + $0x118] sm:$0xff]
    %v141 = vld [vmem:[%s1 + $0x120] sm:$0xff]
    %v142 = vld [vmem:[%s1 + $0x128] sm:$0xff]
    %v143 = vld [vmem:[%s1 + $0x130] sm:$0xff]
    %v144 = vld [vmem:[%s1 + $0x138] sm:$0xff]
    %v145 = vld [vmem:[%s1 + $0x140] sm:$0xff]
    %v146 = vld [vmem:[%s1 + $0x148] sm:$0xff]
    %v147 = vld [vmem:[%s1 + $0x150] sm:$0xff]
    %v148 = vld [vmem:[%s1 + $0x158] sm:$0xff]
    %v149 = vld [vmem:[%s1 + $0x160] sm:$0xff]
    %v150 = vld [vmem:[%s1 + $0x168] sm:$0xff]
    %v151 = vld [vmem:[%s1 + $0x170] sm:$0xff]
    %v152 = vld [vmem:[%s1 + $0x178] sm:$0xff]
    %v153 = vld [vmem:[%s1 + $0x180] sm:$0xff]
    %v154 = vld [vmem:[%s1 + $0x188] sm:$0xff]
    %v155 = vld [vmem:[%s1 + $0x190] sm:$0xff]
    %v156 = vld [vmem:[%s1 + $0x198] sm:$0xff]
    %v157 = vld [vmem:[%s1 + $0x1a0] sm:$0xff]
    %v158 = vld [vmem:[%s1 + $0x1a8] sm:$0xff]
    %v159 = vld [vmem:[%s1 + $0x1b0] sm:$0xff]
    %v160 = vld [vmem:[%s1 + $0x1b8] sm:$0xff]
    %v161 = vld [vmem:[%s1 + $0x1c0] sm:$0xff]
    %v162 = vld [vmem:[%s1 + $0x1c8] sm:$0xff]
    %v163 = vld [vmem:[%s1 + $0x1d0] sm:$0xff]
    %v164 = vld [vmem:[%s1 + $0x1d8] sm:$0xff]
    %v165 = vld [vmem:[%s1 + $0x1e0] sm:$0xff]
    %v166 = vld [vmem:[%s1 + $0x1e8] sm:$0xff]
    %v167 = vld [vmem:[%s1 + $0x1f0] sm:$0xff]
    %v168 = vld [vmem:[%s1 + $0x1f8] sm:$0xff]
    %v169 = vld [vmem:[#allocation2] sm:$0x3]
    %v171 = vlaneseq
    %v172 = vshrl.u32 %v171, 7
    %v173 = vsub.s32 0, %v172
    %v174 = vrot.slane %v169, %v173
    %v175 = vlaneseq
    %v176 = vshrl.u32 %v175, 7
    %v177 = vsub.s32 1, %v176
    %v178 = vrot.slane %v169, %v177
    %v183 = vunpack.c.l.b16 %v103
    %v184 = vunpack.c.h.b16 %v103
    %v185 = vunpack.c.l.b16 %v104
    %v186 = vunpack.c.h.b16 %v104
    %v187 = vpack.c.b16 %v183, %v183
    %v188 = vpack.c.b16 %v184, %v184
    %v189 = vpack.c.b16 %v185, %v185
    %v190 = vpack.c.b16 %v186, %v186
    %v259 = vunpack.c.l.b16 %v105
    %v260 = vunpack.c.h.b16 %v105
    %v261 = vunpack.c.l.b16 %v106
    %v262 = vunpack.c.h.b16 %v106
    %v263 = vunpack.c.l.b16 %v107
    %v264 = vunpack.c.h.b16 %v107
    %v265 = vunpack.c.l.b16 %v108
    %v266 = vunpack.c.h.b16 %v108
    %v267 = vunpack.c.l.b16 %v109
    %v268 = vunpack.c.h.b16 %v109
    %v269 = vunpack.c.l.b16 %v110
    %v270 = vunpack.c.h.b16 %v110
    %v271 = vunpack.c.l.b16 %v111
    %v272 = vunpack.c.h.b16 %v111
    %v273 = vunpack.c.l.b16 %v112
    %v274 = vunpack.c.h.b16 %v112
    %v275 = vunpack.c.l.b16 %v113
    %v276 = vunpack.c.h.b16 %v113
    %v277 = vunpack.c.l.b16 %v114
    %v278 = vunpack.c.h.b16 %v114
    %v279 = vunpack.c.l.b16 %v115
    %v280 = vunpack.c.h.b16 %v115
    %v281 = vunpack.c.l.b16 %v116
    %v282 = vunpack.c.h.b16 %v116
    %v283 = vunpack.c.l.b16 %v117
    %v284 = vunpack.c.h.b16 %v117
    %v285 = vunpack.c.l.b16 %v118
    %v286 = vunpack.c.h.b16 %v118
    %v287 = vunpack.c.l.b16 %v119
    %v288 = vunpack.c.h.b16 %v119
    %v289 = vunpack.c.l.b16 %v120
    %v290 = vunpack.c.h.b16 %v120
    %v291 = vunpack.c.l.b16 %v121
    %v292 = vunpack.c.h.b16 %v121
    %v293 = vunpack.c.l.b16 %v122
    %v294 = vunpack.c.h.b16 %v122
    %v295 = vunpack.c.l.b16 %v123
    %v296 = vunpack.c.h.b16 %v123
    %v297 = vunpack.c.l.b16 %v124
    %v298 = vunpack.c.h.b16 %v124
    %v299 = vunpack.c.l.b16 %v125
    %v300 = vunpack.c.h.b16 %v125
    %v301 = vunpack.c.l.b16 %v126
    %v302 = vunpack.c.h.b16 %v126
    %v303 = vunpack.c.l.b16 %v127
    %v304 = vunpack.c.h.b16 %v127
    %v305 = vunpack.c.l.b16 %v128
    %v306 = vunpack.c.h.b16 %v128
    %v307 = vunpack.c.l.b16 %v129
    %v308 = vunpack.c.h.b16 %v129
    %v309 = vunpack.c.l.b16 %v130
    %v310 = vunpack.c.h.b16 %v130
    %v311 = vunpack.c.l.b16 %v131
    %v312 = vunpack.c.h.b16 %v131
    %v313 = vunpack.c.l.b16 %v132
    %v314 = vunpack.c.h.b16 %v132
    %v315 = vunpack.c.l.b16 %v133
    %v316 = vunpack.c.h.b16 %v133
    %v317 = vunpack.c.l.b16 %v134
    %v318 = vunpack.c.h.b16 %v134
    %v319 = vunpack.c.l.b16 %v135
    %v320 = vunpack.c.h.b16 %v135
    %v321 = vunpack.c.l.b16 %v136
    %v322 = vunpack.c.h.b16 %v136
    %v323 = vunpack.c.l.b16 %v137
    %v324 = vunpack.c.h.b16 %v137
    %v325 = vunpack.c.l.b16 %v138
    %v326 = vunpack.c.h.b16 %v138
    %v327 = vunpack.c.l.b16 %v139
    %v328 = vunpack.c.h.b16 %v139
    %v329 = vunpack.c.l.b16 %v140
    %v330 = vunpack.c.h.b16 %v140
    %v331 = vunpack.c.l.b16 %v141
    %v332 = vunpack.c.h.b16 %v141
    %v333 = vunpack.c.l.b16 %v142
    %v334 = vunpack.c.h.b16 %v142
    %v335 = vunpack.c.l.b16 %v143
    %v336 = vunpack.c.h.b16 %v143
    %v337 = vunpack.c.l.b16 %v144
    %v338 = vunpack.c.h.b16 %v144
    %v339 = vunpack.c.l.b16 %v145
    %v340 = vunpack.c.h.b16 %v145
    %v341 = vunpack.c.l.b16 %v146
    %v342 = vunpack.c.h.b16 %v146
    %v343 = vunpack.c.l.b16 %v147
    %v344 = vunpack.c.h.b16 %v147
    %v345 = vunpack.c.l.b16 %v148
    %v346 = vunpack.c.h.b16 %v148
    %v347 = vunpack.c.l.b16 %v149
    %v348 = vunpack.c.h.b16 %v149
    %v349 = vunpack.c.l.b16 %v150
    %v350 = vunpack.c.h.b16 %v150
    %v351 = vunpack.c.l.b16 %v151
    %v352 = vunpack.c.h.b16 %v151
    %v353 = vunpack.c.l.b16 %v152
    %v354 = vunpack.c.h.b16 %v152
    %v355 = vunpack.c.l.b16 %v153
    %v356 = vunpack.c.h.b16 %v153
    %v357 = vunpack.c.l.b16 %v154
    %v358 = vunpack.c.h.b16 %v154
    %v359 = vunpack.c.l.b16 %v155
    %v360 = vunpack.c.h.b16 %v155
    %v361 = vunpack.c.l.b16 %v156
    %v362 = vunpack.c.h.b16 %v156
    %v363 = vunpack.c.l.b16 %v157
    %v364 = vunpack.c.h.b16 %v157
    %v365 = vunpack.c.l.b16 %v158
    %v366 = vunpack.c.h.b16 %v158
    %v367 = vunpack.c.l.b16 %v159
    %v368 = vunpack.c.h.b16 %v159
    %v369 = vunpack.c.l.b16 %v160
    %v370 = vunpack.c.h.b16 %v160
    %v371 = vunpack.c.l.b16 %v161
    %v372 = vunpack.c.h.b16 %v161
    %v373 = vunpack.c.l.b16 %v162
    %v374 = vunpack.c.h.b16 %v162
    %v375 = vunpack.c.l.b16 %v163
    %v376 = vunpack.c.h.b16 %v163
    %v377 = vunpack.c.l.b16 %v164
    %v378 = vunpack.c.h.b16 %v164
    %v379 = vunpack.c.l.b16 %v165
    %v380 = vunpack.c.h.b16 %v165
    %v381 = vunpack.c.l.b16 %v166
    %v382 = vunpack.c.h.b16 %v166
    %v383 = vunpack.c.l.b16 %v167
    %v384 = vunpack.c.h.b16 %v167
    %v385 = vunpack.c.l.b16 %v168
    %v386 = vunpack.c.h.b16 %v168
    %v387 = vpack.c.b16 %v261, %v259
    %v388 = vpack.c.b16 %v262, %v260
    %v389 = vpack.c.b16 %v265, %v263
    %v390 = vpack.c.b16 %v266, %v264
    %v391 = vpack.c.b16 %v269, %v267
    %v392 = vpack.c.b16 %v270, %v268
    %v393 = vpack.c.b16 %v273, %v271
    %v394 = vpack.c.b16 %v274, %v272
    %v395 = vpack.c.b16 %v277, %v275
    %v396 = vpack.c.b16 %v278, %v276
    %v397 = vpack.c.b16 %v281, %v279
    %v398 = vpack.c.b16 %v282, %v280
    %v399 = vpack.c.b16 %v285, %v283
    %v400 = vpack.c.b16 %v286, %v284
    %v401 = vpack.c.b16 %v289, %v287
    %v402 = vpack.c.b16 %v290, %v288
    %v403 = vpack.c.b16 %v293, %v291
    %v404 = vpack.c.b16 %v294, %v292
    %v405 = vpack.c.b16 %v297, %v295
    %v406 = vpack.c.b16 %v298, %v296
    %v407 = vpack.c.b16 %v301, %v299
    %v408 = vpack.c.b16 %v302, %v300
    %v409 = vpack.c.b16 %v305, %v303
    %v410 = vpack.c.b16 %v306, %v304
    %v411 = vpack.c.b16 %v309, %v307
    %v412 = vpack.c.b16 %v310, %v308
    %v413 = vpack.c.b16 %v313, %v311
    %v414 = vpack.c.b16 %v314, %v312
    %v415 = vpack.c.b16 %v317, %v315
    %v416 = vpack.c.b16 %v318, %v316
    %v417 = vpack.c.b16 %v321, %v319
    %v418 = vpack.c.b16 %v322, %v320
    %v419 = vpack.c.b16 %v325, %v323
    %v420 = vpack.c.b16 %v326, %v324
    %v421 = vpack.c.b16 %v329, %v327
    %v422 = vpack.c.b16 %v330, %v328
    %v423 = vpack.c.b16 %v333, %v331
    %v424 = vpack.c.b16 %v334, %v332
    %v425 = vpack.c.b16 %v337, %v335
    %v426 = vpack.c.b16 %v338, %v336
    %v427 = vpack.c.b16 %v341, %v339
    %v428 = vpack.c.b16 %v342, %v340
    %v429 = vpack.c.b16 %v345, %v343
    %v430 = vpack.c.b16 %v346, %v344
    %v431 = vpack.c.b16 %v349, %v347
    %v432 = vpack.c.b16 %v350, %v348
    %v433 = vpack.c.b16 %v353, %v351
    %v434 = vpack.c.b16 %v354, %v352
    %v435 = vpack.c.b16 %v357, %v355
    %v436 = vpack.c.b16 %v358, %v356
    %v437 = vpack.c.b16 %v361, %v359
    %v438 = vpack.c.b16 %v362, %v360
    %v439 = vpack.c.b16 %v365, %v363
    %v440 = vpack.c.b16 %v366, %v364
    %v441 = vpack.c.b16 %v369, %v367
    %v442 = vpack.c.b16 %v370, %v368
    %v443 = vpack.c.b16 %v373, %v371
    %v444 = vpack.c.b16 %v374, %v372
    %v445 = vpack.c.b16 %v377, %v375
    %v446 = vpack.c.b16 %v378, %v376
    %v447 = vpack.c.b16 %v381, %v379
    %v448 = vpack.c.b16 %v382, %v380
    %v449 = vpack.c.b16 %v385, %v383
    %v450 = vpack.c.b16 %v386, %v384
    %515 = vmatprep.subr.bf16.mxu0 %v388
    %516 = vmatpush1.bf16.msra.mxu0 %v387
    %517 = vmatprep.subr.bf16.mxu0 %v390
    %518 = vmatpush1.bf16.msra.mxu0 %v389
    %519 = vmatprep.subr.bf16.mxu0 %v392
    %520 = vmatpush1.bf16.msra.mxu0 %v391
    %521 = vmatprep.subr.bf16.mxu0 %v394
    %522 = vmatpush1.bf16.msra.mxu0 %v393
    %523 = vmatprep.subr.bf16.mxu0 %v396
    %524 = vmatpush1.bf16.msra.mxu0 %v395
    %525 = vmatprep.subr.bf16.mxu0 %v398
    %526 = vmatpush1.bf16.msra.mxu0 %v397
    %527 = vmatprep.subr.bf16.mxu0 %v400
    %528 = vmatpush1.bf16.msra.mxu0 %v399
    %529 = vmatprep.subr.bf16.mxu0 %v402
    %530 = vmatpush1.bf16.msra.mxu0 %v401
    %531 = vmatprep.subr.bf16.mxu0 %v404
    %532 = vmatpush1.bf16.msra.mxu0 %v403
    %533 = vmatprep.subr.bf16.mxu0 %v406
    %534 = vmatpush1.bf16.msra.mxu0 %v405
    %535 = vmatprep.subr.bf16.mxu0 %v408
    %536 = vmatpush1.bf16.msra.mxu0 %v407
    %537 = vmatprep.subr.bf16.mxu0 %v410
    %538 = vmatpush1.bf16.msra.mxu0 %v409
    %539 = vmatprep.subr.bf16.mxu0 %v412
    %540 = vmatpush1.bf16.msra.mxu0 %v411
    %541 = vmatprep.subr.bf16.mxu0 %v414
    %542 = vmatpush1.bf16.msra.mxu0 %v413
    %543 = vmatprep.subr.bf16.mxu0 %v416
    %544 = vmatpush1.bf16.msra.mxu0 %v415
    %545 = vmatprep.subr.bf16.mxu0 %v418
    %546 = vmatpush1.bf16.msra.mxu0 %v417
    %547 = vmatprep.mubr.bf16.mxu0 %v188
    %548 = vmatmul.mubr.bf16.gmra.mrb[0].mxu0 %v187
    %v549 = vpop.f32.mrb[0].mxu0
    %v550 = vadd.f32 %v174, %v549
    %v551 = vpop.f32.mrb[0].mxu0
    %v552 = vadd.f32 %v178, %v551
    %v553 = vpop.f32.mrb[0].mxu0
    %v554 = vpop.f32.mrb[0].mxu0
    %555 = vdwg.mxu0
    %556 = vmatprep.subr.bf16.mxu0 %v420
    %557 = vmatpush1.bf16.msra.mxu0 %v419
    %558 = vmatprep.subr.bf16.mxu0 %v422
    %559 = vmatpush1.bf16.msra.mxu0 %v421
    %560 = vmatprep.subr.bf16.mxu0 %v424
    %561 = vmatpush1.bf16.msra.mxu0 %v423
    %562 = vmatprep.subr.bf16.mxu0 %v426
    %563 = vmatpush1.bf16.msra.mxu0 %v425
    %564 = vmatprep.subr.bf16.mxu0 %v428
    %565 = vmatpush1.bf16.msra.mxu0 %v427
    %566 = vmatprep.subr.bf16.mxu0 %v430
    %567 = vmatpush1.bf16.msra.mxu0 %v429
    %568 = vmatprep.subr.bf16.mxu0 %v432
    %569 = vmatpush1.bf16.msra.mxu0 %v431
    %570 = vmatprep.subr.bf16.mxu0 %v434
    %571 = vmatpush1.bf16.msra.mxu0 %v433
    %572 = vmatprep.subr.bf16.mxu0 %v436
    %573 = vmatpush1.bf16.msra.mxu0 %v435
    %574 = vmatprep.subr.bf16.mxu0 %v438
    %575 = vmatpush1.bf16.msra.mxu0 %v437
    %576 = vmatprep.subr.bf16.mxu0 %v440
    %577 = vmatpush1.bf16.msra.mxu0 %v439
    %578 = vmatprep.subr.bf16.mxu0 %v442
    %579 = vmatpush1.bf16.msra.mxu0 %v441
    %580 = vmatprep.subr.bf16.mxu0 %v444
    %581 = vmatpush1.bf16.msra.mxu0 %v443
    %582 = vmatprep.subr.bf16.mxu0 %v446
    %583 = vmatpush1.bf16.msra.mxu0 %v445
    %584 = vmatprep.subr.bf16.mxu0 %v448
    %585 = vmatpush1.bf16.msra.mxu0 %v447
    %586 = vmatprep.subr.bf16.mxu0 %v450
    %587 = vmatpush1.bf16.msra.mxu0 %v449
    %588 = vmatprep.mubr.bf16.mxu0 %v190
    %589 = vmatmul.mubr.bf16.gmra.mrb[0].mxu0 %v189
    %v590 = vpop.f32.mrb[0].mxu0
    %v591 = vadd.f32 %v550, %v590
    %v592 = vpop.f32.mrb[0].mxu0
    %v593 = vadd.f32 %v552, %v592
    %v594 = vpop.f32.mrb[0].mxu0
    %v595 = vpop.f32.mrb[0].mxu0
    %596 = vdwg.mxu0
    %v597 = vmax.f32 %v591, 0.0
    %v598 = vmax.f32 %v593, 0.0
    %v599 = vpack.c.bf16 %v597, %v597
    %v600 = vpack.c.bf16 %v598, %v598
    %v601 = vld [vmem:[%s3] sm:$0xf]
    %v602 = vld [vmem:[%s3 + $0x4] sm:$0xf]
    %v603 = vld [vmem:[%s3 + $0x8] sm:$0xf]
    %v604 = vld [vmem:[%s3 + $0xc] sm:$0xf]
    %v605 = vld [vmem:[%s3 + $0x10] sm:$0xf]
    %v606 = vld [vmem:[%s3 + $0x14] sm:$0xf]
    %v607 = vld [vmem:[%s3 + $0x18] sm:$0xf]
    %v608 = vld [vmem:[%s3 + $0x1c] sm:$0xf]
    %v609 = vld [vmem:[%s3 + $0x20] sm:$0xf]
    %v610 = vld [vmem:[%s3 + $0x24] sm:$0xf]
    %v611 = vld [vmem:[%s3 + $0x28] sm:$0xf]
    %v612 = vld [vmem:[%s3 + $0x2c] sm:$0xf]
    %v613 = vld [vmem:[%s3 + $0x30] sm:$0xf]
    %v614 = vld [vmem:[%s3 + $0x34] sm:$0xf]
    %v615 = vld [vmem:[%s3 + $0x38] sm:$0xf]
    %v616 = vld [vmem:[%s3 + $0x3c] sm:$0xf]
    %v617 = vld [vmem:[%s3 + $0x40] sm:$0xf]
    %v618 = vld [vmem:[%s3 + $0x44] sm:$0xf]
    %v619 = vld [vmem:[%s3 + $0x48] sm:$0xf]
    %v620 = vld [vmem:[%s3 + $0x4c] sm:$0xf]
    %v621 = vld [vmem:[%s3 + $0x50] sm:$0xf]
    %v622 = vld [vmem:[%s3 + $0x54] sm:$0xf]
    %v623 = vld [vmem:[%s3 + $0x58] sm:$0xf]
    %v624 = vld [vmem:[%s3 + $0x5c] sm:$0xf]
    %v625 = vld [vmem:[%s3 + $0x60] sm:$0xf]
    %v626 = vld [vmem:[%s3 + $0x64] sm:$0xf]
    %v627 = vld [vmem:[%s3 + $0x68] sm:$0xf]
    %v628 = vld [vmem:[%s3 + $0x6c] sm:$0xf]
    %v629 = vld [vmem:[%s3 + $0x70] sm:$0xf]
    %v630 = vld [vmem:[%s3 + $0x74] sm:$0xf]
    %v631 = vld [vmem:[%s3 + $0x78] sm:$0xf]
    %v632 = vld [vmem:[%s3 + $0x7c] sm:$0xf]
    %v633 = vld [vmem:[%s4] sm:$0x1]
    %v635 = vlaneseq
    %v636 = vshrl.u32 %v635, 7
    %v637 = vsub.s32 0, %v636
    %v638 = vrot.slane %v633, %v637
    %v672 = vunpack.c.l.b16 %v601
    %v673 = vunpack.c.l.b16 %v602
    %v674 = vunpack.c.l.b16 %v603
    %v675 = vunpack.c.l.b16 %v604
    %v676 = vunpack.c.l.b16 %v605
    %v677 = vunpack.c.l.b16 %v606
    %v678 = vunpack.c.l.b16 %v607
    %v679 = vunpack.c.l.b16 %v608
    %v680 = vunpack.c.l.b16 %v609
    %v681 = vunpack.c.l.b16 %v610
    %v682 = vunpack.c.l.b16 %v611
    %v683 = vunpack.c.l.b16 %v612
    %v684 = vunpack.c.l.b16 %v613
    %v685 = vunpack.c.l.b16 %v614
    %v686 = vunpack.c.l.b16 %v615
    %v687 = vunpack.c.l.b16 %v616
    %v688 = vunpack.c.l.b16 %v617
    %v689 = vunpack.c.l.b16 %v618
    %v690 = vunpack.c.l.b16 %v619
    %v691 = vunpack.c.l.b16 %v620
    %v692 = vunpack.c.l.b16 %v621
    %v693 = vunpack.c.l.b16 %v622
    %v694 = vunpack.c.l.b16 %v623
    %v695 = vunpack.c.l.b16 %v624
    %v696 = vunpack.c.l.b16 %v625
    %v697 = vunpack.c.l.b16 %v626
    %v698 = vunpack.c.l.b16 %v627
    %v699 = vunpack.c.l.b16 %v628
    %v700 = vunpack.c.l.b16 %v629
    %v701 = vunpack.c.l.b16 %v630
    %v702 = vunpack.c.l.b16 %v631
    %v703 = vunpack.c.l.b16 %v632
    %v704 = vpack.c.b16 %v673, %v672
    %v705 = vpack.c.b16 %v675, %v674
    %v706 = vpack.c.b16 %v677, %v676
    %v707 = vpack.c.b16 %v679, %v678
    %v708 = vpack.c.b16 %v681, %v680
    %v709 = vpack.c.b16 %v683, %v682
    %v710 = vpack.c.b16 %v685, %v684
    %v711 = vpack.c.b16 %v687, %v686
    %v712 = vpack.c.b16 %v689, %v688
    %v713 = vpack.c.b16 %v691, %v690
    %v714 = vpack.c.b16 %v693, %v692
    %v715 = vpack.c.b16 %v695, %v694
    %v716 = vpack.c.b16 %v697, %v696
    %v717 = vpack.c.b16 %v699, %v698
    %v718 = vpack.c.b16 %v701, %v700
    %v719 = vpack.c.b16 %v703, %v702
    %736 = vmatprep.subr.bf16.mxu0 0
    %737 = vmatpush1.bf16.msra.mxu0 %v704
    %738 = vmatprep.subr.bf16.mxu0 0
    %739 = vmatpush1.bf16.msra.mxu0 %v705
    %740 = vmatprep.subr.bf16.mxu0 0
    %741 = vmatpush1.bf16.msra.mxu0 %v706
    %742 = vmatprep.subr.bf16.mxu0 0
    %743 = vmatpush1.bf16.msra.mxu0 %v707
    %744 = vmatprep.subr.bf16.mxu0 0
    %745 = vmatpush1.bf16.msra.mxu0 %v708
    %746 = vmatprep.subr.bf16.mxu0 0
    %747 = vmatpush1.bf16.msra.mxu0 %v709
    %748 = vmatprep.subr.bf16.mxu0 0
    %749 = vmatpush1.bf16.msra.mxu0 %v710
    %750 = vmatprep.subr.bf16.mxu0 0
    %751 = vmatpush1.bf16.msra.mxu0 %v711
    %752 = vmatprep.subr.bf16.mxu0 0
    %753 = vmatpush1.bf16.msra.mxu0 %v712
    %754 = vmatprep.subr.bf16.mxu0 0
    %755 = vmatpush1.bf16.msra.mxu0 %v713
    %756 = vmatprep.subr.bf16.mxu0 0
    %757 = vmatpush1.bf16.msra.mxu0 %v714
    %758 = vmatprep.subr.bf16.mxu0 0
    %759 = vmatpush1.bf16.msra.mxu0 %v715
    %760 = vmatprep.subr.bf16.mxu0 0
    %761 = vmatpush1.bf16.msra.mxu0 %v716
    %762 = vmatprep.subr.bf16.mxu0 0
    %763 = vmatpush1.bf16.msra.mxu0 %v717
    %764 = vmatprep.subr.bf16.mxu0 0
    %765 = vmatpush1.bf16.msra.mxu0 %v718
    %766 = vmatprep.subr.bf16.mxu0 0
    %767 = vmatpush1.bf16.msra.mxu0 %v719
    %768 = vmatprep.mubr.bf16.mxu0 %v600
    %769 = vmatmul.mubr.bf16.gmra.mrb[0].mxu0 %v599
    %v770 = vpop.f32.mrb[0].mxu0
    %v771 = vadd.f32 %v638, %v770
    %v772 = vpop.f32.mrb[0].mxu0
    %v773 = vpop.f32.mrb[0].mxu0
    %v774 = vpop.f32.mrb[0].mxu0
    %775 = vdwg.mxu0
    %v776 = vmax.f32 %v771, 0.0
    %v777 = vpack.c.bf16 %v776, %v776
    %v778 = vld [vmem:[%s5] sm:$0xf]
    %v779 = vld [vmem:[%s5 + $0x4] sm:$0xf]
    %v780 = vld [vmem:[%s5 + $0x8] sm:$0xf]
    %v781 = vld [vmem:[%s5 + $0xc] sm:$0xf]
    %v782 = vld [vmem:[%s5 + $0x10] sm:$0xf]
    %v783 = vld [vmem:[%s5 + $0x14] sm:$0xf]
    %v784 = vld [vmem:[%s5 + $0x18] sm:$0xf]
    %v785 = vld [vmem:[%s5 + $0x1c] sm:$0xf]
    %v786 = vld [vmem:[%s5 + $0x20] sm:$0xf]
    %v787 = vld [vmem:[%s5 + $0x24] sm:$0xf]
    %v788 = vld [vmem:[%s5 + $0x28] sm:$0xf]
    %v789 = vld [vmem:[%s5 + $0x2c] sm:$0xf]
    %v790 = vld [vmem:[%s5 + $0x30] sm:$0xf]
    %v791 = vld [vmem:[%s5 + $0x34] sm:$0xf]
    %v792 = vld [vmem:[%s5 + $0x38] sm:$0xf]
    %v793 = vld [vmem:[%s5 + $0x3c] sm:$0xf]
    %v794 = vld [vmem:[#allocation4] sm:$0x1]
    %v796 = vlaneseq
    %v797 = vshrl.u32 %v796, 7
    %v798 = vsub.s32 0, %v797
    %v799 = vrot.slane %v794, %v798
    %v817 = vunpack.c.l.b16 %v778
    %v818 = vunpack.c.l.b16 %v779
    %v819 = vunpack.c.l.b16 %v780
    %v820 = vunpack.c.l.b16 %v781
    %v821 = vunpack.c.l.b16 %v782
    %v822 = vunpack.c.l.b16 %v783
    %v823 = vunpack.c.l.b16 %v784
    %v824 = vunpack.c.l.b16 %v785
    %v825 = vunpack.c.l.b16 %v786
    %v826 = vunpack.c.l.b16 %v787
    %v827 = vunpack.c.l.b16 %v788
    %v828 = vunpack.c.l.b16 %v789
    %v829 = vunpack.c.l.b16 %v790
    %v830 = vunpack.c.l.b16 %v791
    %v831 = vunpack.c.l.b16 %v792
    %v832 = vunpack.c.l.b16 %v793
    %v833 = vpack.c.b16 %v818, %v817
    %v834 = vpack.c.b16 %v820, %v819
    %v835 = vpack.c.b16 %v822, %v821
    %v836 = vpack.c.b16 %v824, %v823
    %v837 = vpack.c.b16 %v826, %v825
    %v838 = vpack.c.b16 %v828, %v827
    %v839 = vpack.c.b16 %v830, %v829
    %v840 = vpack.c.b16 %v832, %v831
    %849 = vmatprep.subr.bf16.mxu0 0
    %850 = vmatpush1.bf16.msra.mxu0 %v833
    %851 = vmatprep.subr.bf16.mxu0 0
    %852 = vmatpush1.bf16.msra.mxu0 %v834
    %853 = vmatprep.subr.bf16.mxu0 0
    %854 = vmatpush1.bf16.msra.mxu0 %v835
    %855 = vmatprep.subr.bf16.mxu0 0
    %856 = vmatpush1.bf16.msra.mxu0 %v836
    %857 = vmatprep.subr.bf16.mxu0 0
    %858 = vmatpush1.bf16.msra.mxu0 %v837
    %859 = vmatprep.subr.bf16.mxu0 0
    %860 = vmatpush1.bf16.msra.mxu0 %v838
    %861 = vmatprep.subr.bf16.mxu0 0
    %862 = vmatpush1.bf16.msra.mxu0 %v839
    %863 = vmatprep.subr.bf16.mxu0 0
    %864 = vmatpush1.bf16.msra.mxu0 %v840
    %865 = vmatprep.subr.bf16.mxu0 0
    %866 = vmatpush1.bf16.msra.mxu0 0
    %867 = vmatprep.subr.bf16.mxu0 0
    %868 = vmatpush1.bf16.msra.mxu0 0
    %869 = vmatprep.subr.bf16.mxu0 0
    %870 = vmatpush1.bf16.msra.mxu0 0
    %871 = vmatprep.subr.bf16.mxu0 0
    %872 = vmatpush1.bf16.msra.mxu0 0
    %873 = vmatprep.subr.bf16.mxu0 0
    %874 = vmatpush1.bf16.msra.mxu0 0
    %875 = vmatprep.subr.bf16.mxu0 0
    %876 = vmatpush1.bf16.msra.mxu0 0
    %877 = vmatprep.subr.bf16.mxu0 0
    %878 = vmatpush1.bf16.msra.mxu0 0
    %879 = vmatprep.subr.bf16.mxu0 0
    %880 = vmatpush1.bf16.msra.mxu0 0
    %881 = vmatprep.mubr.bf16.mxu0 0
    %882 = vmatmul.mubr.bf16.gmra.mrb[0].mxu0 %v777
    %v883 = vpop.f32.mrb[0].mxu0
    %v884 = vadd.f32 %v799, %v883
    %v885 = vpop.f32.mrb[0].mxu0
    %v886 = vpop.f32.mrb[0].mxu0
    %v887 = vpop.f32.mrb[0].mxu0
    %888 = vdwg.mxu0
    %v889 = vmax.f32 %v884, 0.0
    %v890 = vpack.c.bf16 %v889, %v889
    %v891 = vld [vmem:[%s7] sm:$0xf]
    %v892 = vld [vmem:[%s7 + $0x4] sm:$0xf]
    %v893 = vld [vmem:[%s7 + $0x8] sm:$0xf]
    %v894 = vld [vmem:[%s7 + $0xc] sm:$0xf]
    %v895 = vld [vmem:[%s7 + $0x10] sm:$0xf]
    %v896 = vld [vmem:[%s7 + $0x14] sm:$0xf]
    %v897 = vld [vmem:[%s7 + $0x18] sm:$0xf]
    %v898 = vld [vmem:[%s7 + $0x1c] sm:$0xf]
    %v899 = vld [vmem:[%s7 + $0x20] sm:$0xf]
    %v900 = vld [vmem:[%s7 + $0x24] sm:$0xf]
    %v901 = vld [vmem:[%s7 + $0x28] sm:$0xf]
    %v902 = vld [vmem:[%s7 + $0x2c] sm:$0xf]
    %v903 = vld [vmem:[%s7 + $0x30] sm:$0xf]
    %v904 = vld [vmem:[%s7 + $0x34] sm:$0xf]
    %v905 = vld [vmem:[%s7 + $0x38] sm:$0xf]
    %v906 = vld [vmem:[%s7 + $0x3c] sm:$0xf]
    %v907 = vld [vmem:[#allocation6] sm:$0x1]
    %v909 = vlaneseq
    %v910 = vshrl.u32 %v909, 7
    %v911 = vsub.s32 0, %v910
    %v912 = vrot.slane %v907, %v911
    %v930 = vunpack.c.l.b16 %v891
    %v931 = vunpack.c.l.b16 %v892
    %v932 = vunpack.c.l.b16 %v893
    %v933 = vunpack.c.l.b16 %v894
    %v934 = vunpack.c.l.b16 %v895
    %v935 = vunpack.c.l.b16 %v896
    %v936 = vunpack.c.l.b16 %v897
    %v937 = vunpack.c.l.b16 %v898
    %v938 = vunpack.c.l.b16 %v899
    %v939 = vunpack.c.l.b16 %v900
    %v940 = vunpack.c.l.b16 %v901
    %v941 = vunpack.c.l.b16 %v902
    %v942 = vunpack.c.l.b16 %v903
    %v943 = vunpack.c.l.b16 %v904
    %v944 = vunpack.c.l.b16 %v905
    %v945 = vunpack.c.l.b16 %v906
    %v946 = vpack.c.b16 %v931, %v930
    %v947 = vpack.c.b16 %v933, %v932
    %v948 = vpack.c.b16 %v935, %v934
    %v949 = vpack.c.b16 %v937, %v936
    %v950 = vpack.c.b16 %v939, %v938
    %v951 = vpack.c.b16 %v941, %v940
    %v952 = vpack.c.b16 %v943, %v942
    %v953 = vpack.c.b16 %v945, %v944
    %962 = vmatprep.subr.bf16.mxu0 0
    %963 = vmatpush1.bf16.msra.mxu0 %v946
    %964 = vmatprep.subr.bf16.mxu0 0
    %965 = vmatpush1.bf16.msra.mxu0 %v947
    %966 = vmatprep.subr.bf16.mxu0 0
    %967 = vmatpush1.bf16.msra.mxu0 %v948
    %968 = vmatprep.subr.bf16.mxu0 0
    %969 = vmatpush1.bf16.msra.mxu0 %v949
    %970 = vmatprep.subr.bf16.mxu0 0
    %971 = vmatpush1.bf16.msra.mxu0 %v950
    %972 = vmatprep.subr.bf16.mxu0 0
    %973 = vmatpush1.bf16.msra.mxu0 %v951
    %974 = vmatprep.subr.bf16.mxu0 0
    %975 = vmatpush1.bf16.msra.mxu0 %v952
    %976 = vmatprep.subr.bf16.mxu0 0
    %977 = vmatpush1.bf16.msra.mxu0 %v953
    %978 = vmatprep.subr.bf16.mxu0 0
    %979 = vmatpush1.bf16.msra.mxu0 0
    %980 = vmatprep.subr.bf16.mxu0 0
    %981 = vmatpush1.bf16.msra.mxu0 0
    %982 = vmatprep.subr.bf16.mxu0 0
    %983 = vmatpush1.bf16.msra.mxu0 0
    %984 = vmatprep.subr.bf16.mxu0 0
    %985 = vmatpush1.bf16.msra.mxu0 0
    %986 = vmatprep.subr.bf16.mxu0 0
    %987 = vmatpush1.bf16.msra.mxu0 0
    %988 = vmatprep.subr.bf16.mxu0 0
    %989 = vmatpush1.bf16.msra.mxu0 0
    %990 = vmatprep.subr.bf16.mxu0 0
    %991 = vmatpush1.bf16.msra.mxu0 0
    %992 = vmatprep.subr.bf16.mxu0 0
    %993 = vmatpush1.bf16.msra.mxu0 0
    %994 = vmatprep.mubr.bf16.mxu0 0
    %995 = vmatmul.mubr.bf16.gmra.mrb[0].mxu0 %v890
    %v996 = vpop.f32.mrb[0].mxu0
    %v997 = vadd.f32 %v912, %v996
    %v998 = vpop.f32.mrb[0].mxu0
    %v999 = vpop.f32.mrb[0].mxu0
    %v1000 = vpop.f32.mrb[0].mxu0
    %1001 = vdwg.mxu0
    %v1002 = vmax.f32 %v997, 0.0
    %v1003 = vpack.c.bf16 %v1002, %v1002
    %v1004 = vld [vmem:[%s9] sm:$0xf]
    %v1005 = vld [vmem:[%s9 + $0x4] sm:$0xf]
    %v1006 = vld [vmem:[%s9 + $0x8] sm:$0xf]
    %v1007 = vld [vmem:[%s9 + $0xc] sm:$0xf]
    %v1008 = vld [vmem:[#allocation7] sm:$0x1]
    %v1010 = vlaneseq
    %v1011 = vshrl.u32 %v1010, 7
    %v1012 = vsub.s32 0, %v1011
    %v1013 = vrot.slane %v1008, %v1012
    %v1019 = vunpack.c.l.b16 %v1004
    %v1020 = vunpack.c.l.b16 %v1005
    %v1021 = vunpack.c.l.b16 %v1006
    %v1022 = vunpack.c.l.b16 %v1007
    %v1023 = vpack.c.b16 %v1020, %v1019
    %v1024 = vpack.c.b16 %v1022, %v1021
    %vm1027 = vcmask 261120
    %v1029 = vsel %vm1027, %v1003, 0
    %1031 = vmatprep.subr.bf16.mxu0 0
    %1032 = vmatpush1.bf16.msra.mxu0 %v1023
    %1033 = vmatprep.subr.bf16.mxu0 0
    %1034 = vmatpush1.bf16.msra.mxu0 %v1024
    %1035 = vmatprep.subr.bf16.mxu0 0
    %1036 = vmatpush1.bf16.msra.mxu0 0
    %1037 = vmatprep.subr.bf16.mxu0 0
    %1038 = vmatpush1.bf16.msra.mxu0 0
    %1039 = vmatprep.subr.bf16.mxu0 0
    %1040 = vmatpush1.bf16.msra.mxu0 0
    %1041 = vmatprep.subr.bf16.mxu0 0
    %1042 = vmatpush1.bf16.msra.mxu0 0
    %1043 = vmatprep.subr.bf16.mxu0 0
    %1044 = vmatpush1.bf16.msra.mxu0 0
    %1045 = vmatprep.subr.bf16.mxu0 0
    %1046 = vmatpush1.bf16.msra.mxu0 0
    %1047 = vmatprep.subr.bf16.mxu0 0
    %1048 = vmatpush1.bf16.msra.mxu0 0
    %1049 = vmatprep.subr.bf16.mxu0 0
    %1050 = vmatpush1.bf16.msra.mxu0 0
    %1051 = vmatprep.subr.bf16.mxu0 0
    %1052 = vmatpush1.bf16.msra.mxu0 0
    %1053 = vmatprep.subr.bf16.mxu0 0
    %1054 = vmatpush1.bf16.msra.mxu0 0
    %1055 = vmatprep.subr.bf16.mxu0 0
    %1056 = vmatpush1.bf16.msra.mxu0 0
    %1057 = vmatprep.subr.bf16.mxu0 0
    %1058 = vmatpush1.bf16.msra.mxu0 0
    %1059 = vmatprep.subr.bf16.mxu0 0
    %1060 = vmatpush1.bf16.msra.mxu0 0
    %1061 = vmatprep.subr.bf16.mxu0 0
    %1062 = vmatpush1.bf16.msra.mxu0 0
    %1063 = vmatprep.mubr.bf16.mxu0 0
    %1064 = vmatmul.mubr.bf16.gmra.mrb[0].mxu0 %v1029
    %v1065 = vpop.f32.mrb[0].mxu0
    %v1066 = vadd.f32 %v1013, %v1065
    %v1067 = vpop.f32.mrb[0].mxu0
    %v1068 = vpop.f32.mrb[0].mxu0
    %v1069 = vpop.f32.mrb[0].mxu0
    %1070 = vdwg.mxu0
    %v1071 = vmax.f32 %v1066, 0.0
    %v1072 = vpack.c.bf16 %v1071, %v1071
    %v1073 = vld [vmem:[%s11] sm:$0xf]
    %v1074 = vld [vmem:[%s11 + $0x4] sm:$0xf]
    %v1075 = vld [vmem:[#allocation9] sm:$0x1]
    %v1077 = vlaneseq
    %v1078 = vshrl.u32 %v1077, 7
    %v1079 = vsub.s32 0, %v1078
    %v1080 = vrot.slane %v1075, %v1079
    %v1084 = vunpack.c.l.b16 %v1073
    %v1085 = vunpack.c.l.b16 %v1074
    %v1086 = vpack.c.b16 %v1085, %v1084
    %vm1088 = vcmask 130048
    %v1090 = vsel %vm1088, %v1072, 0
    %1092 = vmatprep.subr.bf16.mxu0 0
    %1093 = vmatpush1.bf16.msra.mxu0 %v1086
    %1094 = vmatprep.subr.bf16.mxu0 0
    %1095 = vmatpush1.bf16.msra.mxu0 0
    %1096 = vmatprep.subr.bf16.mxu0 0
    %1097 = vmatpush1.bf16.msra.mxu0 0
    %1098 = vmatprep.subr.bf16.mxu0 0
    %1099 = vmatpush1.bf16.msra.mxu0 0
    %1100 = vmatprep.subr.bf16.mxu0 0
    %1101 = vmatpush1.bf16.msra.mxu0 0
    %1102 = vmatprep.subr.bf16.mxu0 0
    %1103 = vmatpush1.bf16.msra.mxu0 0
    %1104 = vmatprep.subr.bf16.mxu0 0
    %1105 = vmatpush1.bf16.msra.mxu0 0
    %1106 = vmatprep.subr.bf16.mxu0 0
    %1107 = vmatpush1.bf16.msra.mxu0 0
    %1108 = vmatprep.subr.bf16.mxu0 0
    %1109 = vmatpush1.bf16.msra.mxu0 0
    %1110 = vmatprep.subr.bf16.mxu0 0
    %1111 = vmatpush1.bf16.msra.mxu0 0
    %1112 = vmatprep.subr.bf16.mxu0 0
    %1113 = vmatpush1.bf16.msra.mxu0 0
    %1114 = vmatprep.subr.bf16.mxu0 0
    %1115 = vmatpush1.bf16.msra.mxu0 0
    %1116 = vmatprep.subr.bf16.mxu0 0
    %1117 = vmatpush1.bf16.msra.mxu0 0
    %1118 = vmatprep.subr.bf16.mxu0 0
    %1119 = vmatpush1.bf16.msra.mxu0 0
    %1120 = vmatprep.subr.bf16.mxu0 0
    %1121 = vmatpush1.bf16.msra.mxu0 0
    %1122 = vmatprep.subr.bf16.mxu0 0
    %1123 = vmatpush1.bf16.msra.mxu0 0
    %1124 = vmatprep.mubr.bf16.mxu0 0
    %1125 = vmatmul.mubr.bf16.gmra.mrb[0].mxu0 %v1090
    %v1126 = vpop.f32.mrb[0].mxu0
    %v1127 = vadd.f32 %v1080, %v1126
    %v1128 = vpop.f32.mrb[0].mxu0
    %v1129 = vpop.f32.mrb[0].mxu0
    %v1130 = vpop.f32.mrb[0].mxu0
    %1131 = vdwg.mxu0
    %vm1132 = vcmask 15360
    %1133 = vst.msk [vmem:[%s13] sm:$0xff] %vm1132, %v1127
    // Predicated region
    $region74: #{net_forward.5} parent=1 // pred_check
      _
    $region75: #{net_forward.5} parent=1 // pred_check_branch
      %1135 = sbr.rel (0) target = $region77
    $region76: #{net_forward.5} parent=1 // pred_region
      _
    $region77: #{net_forward.5} parent=1 // pred_fallthru
      _
    // Predicated region
    $region78: #{net_forward.5} parent=1 // pred_check
      _
    $region79: #{net_forward.5} parent=1 // pred_check_branch
      %1137 = sbr.rel (0) target = $region81
    $region80: #{net_forward.5} parent=1 // pred_region
      _
    $region81: #{net_forward.5} parent=1 // pred_fallthru
      _
    %1138 = vsyncpa [#allocation3], 1
    %1139 = vsyncpa [#allocation5], 1
    %1140 = vsyncpa [#allocation8], 1

</llo_original>
